<compile_context>
chip_gen: v6e
topology: v6e:2x2x1
jax: 0.10.0
libtpu: 0.0.40
codegen_flags: <defaults>
</compile_context>

<pallas_src>
import functools
import math

import jax
import jax.numpy as jnp
import numpy as np
from jax import lax
from jax.experimental import pallas as pl
from jax.experimental.pallas import tpu as pltpu


def _conv_bn_silu_kernel(x_ref, w_ref, b_ref, o_ref, *, k, s, wo):
    """One (row_tile, c2_tile) block of fused conv + BN + SiLU.

    x_ref: (k*s, th, Wq, c1)  bf16  row-shifted / W-phased input slabs
    w_ref: (k*k, c1, tn)      bf16  BN-scale-folded conv weights
    b_ref: (1, tn)            f32   folded BN bias
    o_ref: (th*wo, tn)        f32   output tile (lane-dense, tn % 128 == 0)
    """
    th = x_ref.shape[1]
    c1 = x_ref.shape[3]
    tn = o_ref.shape[-1]

    acc = jnp.zeros((th * wo, tn), jnp.float32)
    for di in range(k):                       # kernel row taps (static unroll)
        for p in range(s):                    # stride phase along W
            taps = [dj for dj in range(k) if dj % s == p]
            if not taps:
                continue
            xrow = x_ref[di * s + p]          # (th, Wq, c1) bf16 — one VMEM load per slab
            for dj in taps:                   # kernel col taps in this phase
                q0 = dj // s
                xt = xrow[:, q0:q0 + wo, :]   # (th, wo, c1) static slice
                lhs = xt.reshape(th * wo, c1)
                acc = acc + jnp.dot(lhs, w_ref[di * k + dj],
                                    preferred_element_type=jnp.float32)

    y = acc + b_ref[...]                      # folded BN bias (f32)
    y = y * jax.nn.sigmoid(y)                 # SiLU in f32
    o_ref[...] = y.astype(o_ref.dtype)


def conv_bn_silu(x, weight, gamma, beta, running_mean, running_var,
                 *, k=3, s=1, p=None, eps=1e-3, block_h=None, block_c2=None):
    """Forward of Conv(c1, c2, k, s): act(bn(conv(x))), BN in eval mode (running stats)."""
    N, c1, H, W = x.shape
    c2 = weight.shape[0]
    pad = (k // 2) if p is None else p        # autopad(k, p, d=1)
    Ho = (H + 2 * pad - k) // s + 1
    Wo = (W + 2 * pad - k) // s + 1

    # ---- fold BN into weight + bias, pad c2 lane-dense, cast to bf16 ---------
    scale = gamma / jnp.sqrt(running_var + eps)               # (c2,)
    bias = beta - running_mean * scale                        # (c2,)
    c2p = ((c2 + 127) // 128) * 128
    wf = (weight * scale[:, None, None, None]).transpose(2, 3, 1, 0)   # (k, k, c1, c2)
    wf = wf.reshape(k * k, c1, c2)
    wf = jnp.pad(wf, ((0, 0), (0, 0), (0, c2p - c2))).astype(jnp.bfloat16)
    bias_p = jnp.pad(bias, (0, c2p - c2)).reshape(1, c2p).astype(jnp.float32)

    # ---- row-shifted / stride-phased NHWC stack in bf16 ----------------------
    # xs[di*s + ph, n*Ho + h, q, ci] == x_padded[n, h*s + di, ph + q*s, ci]
    Wq = (k - 1) // s + Wo
    Wp_needed = max(W + 2 * pad, s * Wq)
    x_nhwc = x.transpose(0, 2, 3, 1).astype(jnp.bfloat16)
    xp = jnp.pad(x_nhwc, ((0, 0), (pad, pad),
                          (pad, pad + (Wp_needed - (W + 2 * pad))), (0, 0)))
    slabs = []
    for di in range(k):
        xr = xp[:, di:di + (Ho - 1) * s + 1:s, :, :]          # (N, Ho, Wp_needed, c1)
        for ph in range(s):
            slabs.append(xr[:, :, ph:ph + (Wq - 1) * s + 1:s, :])   # (N, Ho, Wq, c1)
    xs = jnp.stack(slabs, axis=0).reshape(k * s, N * Ho, Wq, c1)

    # ---- tiling ---------------------------------------------------------------
    m_rows = N * Ho
    if block_h is None:
        block_h = max(1, min(m_rows, -(-512 // Wo)))          # ~512 output rows / tile
    block_h = max(1, min(block_h, m_rows))
    mult = 8 // math.gcd(Wo, 8)                               # keep th*Wo % 8 == 0
    block_h = -(-block_h // mult) * mult
    mp = -(-m_rows // block_h) * block_h
    if mp != m_rows:
        xs = jnp.pad(xs, ((0, 0), (0, mp - m_rows), (0, 0), (0, 0)))

    if block_c2 is None:
        block_c2 = min(c2p, 256)
    block_c2 = max(128, (block_c2 // 128) * 128)
    while c2p % block_c2 != 0:
        block_c2 -= 128

    grid = (mp // block_h, c2p // block_c2)

    out = pl.pallas_call(
        functools.partial(_conv_bn_silu_kernel, k=k, s=s, wo=Wo),
        out_shape=jax.ShapeDtypeStruct((mp * Wo, c2p), jnp.float32),
        grid_spec=pltpu.PrefetchScalarGridSpec(
            num_scalar_prefetch=0,
            grid=grid,
            in_specs=[
                pl.BlockSpec((k * s, block_h, Wq, c1), lambda i, j: (0, i, 0, 0)),
                pl.BlockSpec((k * k, c1, block_c2), lambda i, j: (0, 0, j)),
                pl.BlockSpec((1, block_c2), lambda i, j: (0, j)),
            ],
            out_specs=pl.BlockSpec((block_h * Wo, block_c2), lambda i, j: (i, j)),
        ),
        compiler_params=pltpu.CompilerParams(
            dimension_semantics=("parallel", "parallel")),
    )(xs, wf, bias_p)

    out = out[:m_rows * Wo].reshape(N, Ho, Wo, c2p)[..., :c2]
    return out.transpose(0, 3, 1, 2).astype(x.dtype)          # NCHW at the module boundary


def _reference(x, weight, gamma, beta, mean, var, *, k=3, s=1, eps=1e-3):
    pad = k // 2
    y = lax.conv_general_dilated(
        x, weight, window_strides=(s, s), padding=[(pad, pad), (pad, pad)],
        dimension_numbers=("NCHW", "OIHW", "NCHW"))
    scale = (gamma / jnp.sqrt(var + eps)).reshape(1, -1, 1, 1)
    bias = (beta - mean * gamma / jnp.sqrt(var + eps)).reshape(1, -1, 1, 1)
    y = y * scale + bias
    return y * jax.nn.sigmoid(y)


if __name__ == "__main__":
    # Conv(c1=4, c2=8, k=3, s=1) on a small NCHW input.
    N, C1, H, W = 2, 4, 16, 16
    C2, K, S = 8, 3, 1

    key = jax.random.PRNGKey(0)
    kx, kw, kg, kb, km, kv = jax.random.split(key, 6)
    x = jax.random.normal(kx, (N, C1, H, W), dtype=jnp.float32)
    weight = jax.random.normal(kw, (C2, C1, K, K), dtype=jnp.float32) * 0.1
    gamma = jax.random.normal(kg, (C2,), dtype=jnp.float32) * 0.1 + 1.0
    beta = jax.random.normal(kb, (C2,), dtype=jnp.float32) * 0.1
    running_mean = jax.random.normal(km, (C2,), dtype=jnp.float32) * 0.1
    running_var = jax.random.uniform(kv, (C2,), dtype=jnp.float32,
                                     minval=0.5, maxval=1.5)

    fn = jax.jit(functools.partial(conv_bn_silu, k=K, s=S, eps=1e-3, block_h=8))
    out = jax.block_until_ready(fn(x, weight, gamma, beta, running_mean, running_var))

    ref = _reference(x, weight, gamma, beta, running_mean, running_var,
                     k=K, s=S, eps=1e-3)
    # bf16 MXU operands -> looser tolerance than the all-f32 version.
    np.testing.assert_allclose(np.asarray(out), np.asarray(ref),
                               rtol=2e-2, atol=2e-2)
    print("KERNEL_OK")
</pallas_src>

<mosaic_0001>
module attributes {stable_mosaic.version = 11 : i64} {
  func.func @_conv_bn_silu_kernel(%arg0: i32, %arg1: i32, %arg2: memref<3x8x18x4xbf16, #tpu.memory_space<vmem>>, %arg3: memref<9x4x128xbf16, #tpu.memory_space<vmem>>, %arg4: memref<1x128xf32, #tpu.memory_space<vmem>>, %arg5: memref<128x128xf32, #tpu.memory_space<vmem>>) attributes {dimension_semantics = [#tpu.dimension_semantics<parallel>, #tpu.dimension_semantics<parallel>], iteration_bounds = array<i64: 4, 1>, scalar_prefetch = 0 : i64, scratch_operands = 0 : i64, tpu.core_type = #tpu.core_type<tc>, window_params = [{transform_indices = @transform_0, window_bounds = array<i64: 3, 8, 18, 4>}, {transform_indices = @transform_1, window_bounds = array<i64: 9, 4, 128>}, {transform_indices = @transform_2, window_bounds = array<i64: 1, 128>}, {transform_indices = @transform_3, window_bounds = array<i64: 128, 128>}]} {
    %cst = arith.constant 0.000000e+00 : f32
    %0 = vector.broadcast %cst : f32 to vector<128x128xf32>
    %c0 = arith.constant 0 : index
    %c0_0 = arith.constant 0 : index
    %c0_1 = arith.constant 0 : index
    %c0_2 = arith.constant 0 : index
    %1 = vector.load %arg2[%c0, %c0_0, %c0_1, %c0_2] : memref<3x8x18x4xbf16, #tpu.memory_space<vmem>>, vector<1x8x18x4xbf16>
    %2 = vector.shape_cast %1 : vector<1x8x18x4xbf16> to vector<8x18x4xbf16>
    %3 = vector.extract_strided_slice %2 {offsets = [0, 0, 0], sizes = [8, 16, 4], strides = [1, 1, 1]} : vector<8x18x4xbf16> to vector<8x16x4xbf16>
    %4 = vector.shape_cast %3 : vector<8x16x4xbf16> to vector<128x4xbf16>
    %c0_3 = arith.constant 0 : index
    %c0_4 = arith.constant 0 : index
    %c0_5 = arith.constant 0 : index
    %5 = vector.load %arg3[%c0_3, %c0_4, %c0_5] : memref<9x4x128xbf16, #tpu.memory_space<vmem>>, vector<1x4x128xbf16>
    %6 = vector.shape_cast %5 : vector<1x4x128xbf16> to vector<4x128xbf16>
    %cst_6 = arith.constant dense<0.000000e+00> : vector<128x128xf32>
    %7 = tpu.matmul %4, %6, %cst_6 {dimension_numbers = #tpu.dot_dimension_numbers<[1], [0], [0], [1], [0, 0, 1, 1], [], []>} : vector<128x4xbf16>, vector<4x128xbf16>, vector<128x128xf32> -> vector<128x128xf32>
    %8 = arith.addf %0, %7 : vector<128x128xf32>
    %9 = vector.extract_strided_slice %2 {offsets = [0, 1, 0], sizes = [8, 16, 4], strides = [1, 1, 1]} : vector<8x18x4xbf16> to vector<8x16x4xbf16>
    %10 = vector.shape_cast %9 : vector<8x16x4xbf16> to vector<128x4xbf16>
    %c1 = arith.constant 1 : index
    %c0_7 = arith.constant 0 : index
    %c0_8 = arith.constant 0 : index
    %11 = vector.load %arg3[%c1, %c0_7, %c0_8] : memref<9x4x128xbf16, #tpu.memory_space<vmem>>, vector<1x4x128xbf16>
    %12 = vector.shape_cast %11 : vector<1x4x128xbf16> to vector<4x128xbf16>
    %cst_9 = arith.constant dense<0.000000e+00> : vector<128x128xf32>
    %13 = tpu.matmul %10, %12, %cst_9 {dimension_numbers = #tpu.dot_dimension_numbers<[1], [0], [0], [1], [0, 0, 1, 1], [], []>} : vector<128x4xbf16>, vector<4x128xbf16>, vector<128x128xf32> -> vector<128x128xf32>
    %14 = arith.addf %8, %13 : vector<128x128xf32>
    %15 = vector.extract_strided_slice %2 {offsets = [0, 2, 0], sizes = [8, 16, 4], strides = [1, 1, 1]} : vector<8x18x4xbf16> to vector<8x16x4xbf16>
    %16 = vector.shape_cast %15 : vector<8x16x4xbf16> to vector<128x4xbf16>
    %c2 = arith.constant 2 : index
    %c0_10 = arith.constant 0 : index
    %c0_11 = arith.constant 0 : index
    %17 = vector.load %arg3[%c2, %c0_10, %c0_11] : memref<9x4x128xbf16, #tpu.memory_space<vmem>>, vector<1x4x128xbf16>
    %18 = vector.shape_cast %17 : vector<1x4x128xbf16> to vector<4x128xbf16>
    %cst_12 = arith.constant dense<0.000000e+00> : vector<128x128xf32>
    %19 = tpu.matmul %16, %18, %cst_12 {dimension_numbers = #tpu.dot_dimension_numbers<[1], [0], [0], [1], [0, 0, 1, 1], [], []>} : vector<128x4xbf16>, vector<4x128xbf16>, vector<128x128xf32> -> vector<128x128xf32>
    %20 = arith.addf %14, %19 : vector<128x128xf32>
    %c1_13 = arith.constant 1 : index
    %c0_14 = arith.constant 0 : index
    %c0_15 = arith.constant 0 : index
    %c0_16 = arith.constant 0 : index
    %21 = vector.load %arg2[%c1_13, %c0_14, %c0_15, %c0_16] : memref<3x8x18x4xbf16, #tpu.memory_space<vmem>>, vector<1x8x18x4xbf16>
    %22 = vector.shape_cast %21 : vector<1x8x18x4xbf16> to vector<8x18x4xbf16>
    %23 = vector.extract_strided_slice %22 {offsets = [0, 0, 0], sizes = [8, 16, 4], strides = [1, 1, 1]} : vector<8x18x4xbf16> to vector<8x16x4xbf16>
    %24 = vector.shape_cast %23 : vector<8x16x4xbf16> to vector<128x4xbf16>
    %c3 = arith.constant 3 : index
    %c0_17 = arith.constant 0 : index
    %c0_18 = arith.constant 0 : index
    %25 = vector.load %arg3[%c3, %c0_17, %c0_18] : memref<9x4x128xbf16, #tpu.memory_space<vmem>>, vector<1x4x128xbf16>
    %26 = vector.shape_cast %25 : vector<1x4x128xbf16> to vector<4x128xbf16>
    %cst_19 = arith.constant dense<0.000000e+00> : vector<128x128xf32>
    %27 = tpu.matmul %24, %26, %cst_19 {dimension_numbers = #tpu.dot_dimension_numbers<[1], [0], [0], [1], [0, 0, 1, 1], [], []>} : vector<128x4xbf16>, vector<4x128xbf16>, vector<128x128xf32> -> vector<128x128xf32>
    %28 = arith.addf %20, %27 : vector<128x128xf32>
    %29 = vector.extract_strided_slice %22 {offsets = [0, 1, 0], sizes = [8, 16, 4], strides = [1, 1, 1]} : vector<8x18x4xbf16> to vector<8x16x4xbf16>
    %30 = vector.shape_cast %29 : vector<8x16x4xbf16> to vector<128x4xbf16>
    %c4 = arith.constant 4 : index
    %c0_20 = arith.constant 0 : index
    %c0_21 = arith.constant 0 : index
    %31 = vector.load %arg3[%c4, %c0_20, %c0_21] : memref<9x4x128xbf16, #tpu.memory_space<vmem>>, vector<1x4x128xbf16>
    %32 = vector.shape_cast %31 : vector<1x4x128xbf16> to vector<4x128xbf16>
    %cst_22 = arith.constant dense<0.000000e+00> : vector<128x128xf32>
    %33 = tpu.matmul %30, %32, %cst_22 {dimension_numbers = #tpu.dot_dimension_numbers<[1], [0], [0], [1], [0, 0, 1, 1], [], []>} : vector<128x4xbf16>, vector<4x128xbf16>, vector<128x128xf32> -> vector<128x128xf32>
    %34 = arith.addf %28, %33 : vector<128x128xf32>
    %35 = vector.extract_strided_slice %22 {offsets = [0, 2, 0], sizes = [8, 16, 4], strides = [1, 1, 1]} : vector<8x18x4xbf16> to vector<8x16x4xbf16>
    %36 = vector.shape_cast %35 : vector<8x16x4xbf16> to vector<128x4xbf16>
    %c5 = arith.constant 5 : index
    %c0_23 = arith.constant 0 : index
    %c0_24 = arith.constant 0 : index
    %37 = vector.load %arg3[%c5, %c0_23, %c0_24] : memref<9x4x128xbf16, #tpu.memory_space<vmem>>, vector<1x4x128xbf16>
    %38 = vector.shape_cast %37 : vector<1x4x128xbf16> to vector<4x128xbf16>
    %cst_25 = arith.constant dense<0.000000e+00> : vector<128x128xf32>
    %39 = tpu.matmul %36, %38, %cst_25 {dimension_numbers = #tpu.dot_dimension_numbers<[1], [0], [0], [1], [0, 0, 1, 1], [], []>} : vector<128x4xbf16>, vector<4x128xbf16>, vector<128x128xf32> -> vector<128x128xf32>
    %40 = arith.addf %34, %39 : vector<128x128xf32>
    %c2_26 = arith.constant 2 : index
    %c0_27 = arith.constant 0 : index
    %c0_28 = arith.constant 0 : index
    %c0_29 = arith.constant 0 : index
    %41 = vector.load %arg2[%c2_26, %c0_27, %c0_28, %c0_29] : memref<3x8x18x4xbf16, #tpu.memory_space<vmem>>, vector<1x8x18x4xbf16>
    %42 = vector.shape_cast %41 : vector<1x8x18x4xbf16> to vector<8x18x4xbf16>
    %43 = vector.extract_strided_slice %42 {offsets = [0, 0, 0], sizes = [8, 16, 4], strides = [1, 1, 1]} : vector<8x18x4xbf16> to vector<8x16x4xbf16>
    %44 = vector.shape_cast %43 : vector<8x16x4xbf16> to vector<128x4xbf16>
    %c6 = arith.constant 6 : index
    %c0_30 = arith.constant 0 : index
    %c0_31 = arith.constant 0 : index
    %45 = vector.load %arg3[%c6, %c0_30, %c0_31] : memref<9x4x128xbf16, #tpu.memory_space<vmem>>, vector<1x4x128xbf16>
    %46 = vector.shape_cast %45 : vector<1x4x128xbf16> to vector<4x128xbf16>
    %cst_32 = arith.constant dense<0.000000e+00> : vector<128x128xf32>
    %47 = tpu.matmul %44, %46, %cst_32 {dimension_numbers = #tpu.dot_dimension_numbers<[1], [0], [0], [1], [0, 0, 1, 1], [], []>} : vector<128x4xbf16>, vector<4x128xbf16>, vector<128x128xf32> -> vector<128x128xf32>
    %48 = arith.addf %40, %47 : vector<128x128xf32>
    %49 = vector.extract_strided_slice %42 {offsets = [0, 1, 0], sizes = [8, 16, 4], strides = [1, 1, 1]} : vector<8x18x4xbf16> to vector<8x16x4xbf16>
    %50 = vector.shape_cast %49 : vector<8x16x4xbf16> to vector<128x4xbf16>
    %c7 = arith.constant 7 : index
    %c0_33 = arith.constant 0 : index
    %c0_34 = arith.constant 0 : index
    %51 = vector.load %arg3[%c7, %c0_33, %c0_34] : memref<9x4x128xbf16, #tpu.memory_space<vmem>>, vector<1x4x128xbf16>
    %52 = vector.shape_cast %51 : vector<1x4x128xbf16> to vector<4x128xbf16>
    %cst_35 = arith.constant dense<0.000000e+00> : vector<128x128xf32>
    %53 = tpu.matmul %50, %52, %cst_35 {dimension_numbers = #tpu.dot_dimension_numbers<[1], [0], [0], [1], [0, 0, 1, 1], [], []>} : vector<128x4xbf16>, vector<4x128xbf16>, vector<128x128xf32> -> vector<128x128xf32>
    %54 = arith.addf %48, %53 : vector<128x128xf32>
    %55 = vector.extract_strided_slice %42 {offsets = [0, 2, 0], sizes = [8, 16, 4], strides = [1, 1, 1]} : vector<8x18x4xbf16> to vector<8x16x4xbf16>
    %56 = vector.shape_cast %55 : vector<8x16x4xbf16> to vector<128x4xbf16>
    %c8 = arith.constant 8 : index
    %c0_36 = arith.constant 0 : index
    %c0_37 = arith.constant 0 : index
    %57 = vector.load %arg3[%c8, %c0_36, %c0_37] : memref<9x4x128xbf16, #tpu.memory_space<vmem>>, vector<1x4x128xbf16>
    %58 = vector.shape_cast %57 : vector<1x4x128xbf16> to vector<4x128xbf16>
    %cst_38 = arith.constant dense<0.000000e+00> : vector<128x128xf32>
    %59 = tpu.matmul %56, %58, %cst_38 {dimension_numbers = #tpu.dot_dimension_numbers<[1], [0], [0], [1], [0, 0, 1, 1], [], []>} : vector<128x4xbf16>, vector<4x128xbf16>, vector<128x128xf32> -> vector<128x128xf32>
    %60 = arith.addf %54, %59 : vector<128x128xf32>
    %c0_39 = arith.constant 0 : index
    %c0_40 = arith.constant 0 : index
    %61 = vector.load %arg4[%c0_39, %c0_40] : memref<1x128xf32, #tpu.memory_space<vmem>>, vector<1x128xf32>
    %62 = vector.broadcast %61 : vector<1x128xf32> to vector<128x128xf32>
    %63 = arith.addf %60, %62 : vector<128x128xf32>
    %64 = arith.negf %63 : vector<128x128xf32>
    %65 = math.exp %64 : vector<128x128xf32>
    %cst_41 = arith.constant 1.000000e+00 : f32
    %66 = vector.broadcast %cst_41 : f32 to vector<128x128xf32>
    %67 = arith.addf %66, %65 : vector<128x128xf32>
    %68 = arith.divf %66, %67 : vector<128x128xf32>
    %69 = arith.mulf %63, %68 : vector<128x128xf32>
    %c0_42 = arith.constant 0 : index
    %c0_43 = arith.constant 0 : index
    %70 = vector.load %arg5[%c0_42, %c0_43] : memref<128x128xf32, #tpu.memory_space<vmem>>, vector<128x128xf32>
    tpu.vector_store %arg5[%c0_42, %c0_43], %69 {strides = array<i32>} : memref<128x128xf32, #tpu.memory_space<vmem>>, vector<128x128xf32>,
    return
  }
  func.func @transform_0(%arg0: i32, %arg1: i32) -> (i32, i32, i32, i32) {
    %c0_i32 = arith.constant 0 : i32
    %c0_i32_0 = arith.constant 0 : i32
    %c0_i32_1 = arith.constant 0 : i32
    %c0_i32_2 = arith.constant 0 : i32
    return %c0_i32, %arg0, %c0_i32_0, %c0_i32_1 : i32, i32, i32, i32
  }
  func.func @transform_1(%arg0: i32, %arg1: i32) -> (i32, i32, i32) {
    %c0_i32 = arith.constant 0 : i32
    %c0_i32_0 = arith.constant 0 : i32
    %c0_i32_1 = arith.constant 0 : i32
    return %c0_i32, %c0_i32_0, %arg1 : i32, i32, i32
  }
  func.func @transform_2(%arg0: i32, %arg1: i32) -> (i32, i32) {
    %c0_i32 = arith.constant 0 : i32
    %c0_i32_0 = arith.constant 0 : i32
    return %c0_i32, %arg1 : i32, i32
  }
  func.func @transform_3(%arg0: i32, %arg1: i32) -> (i32, i32) {
    %c0_i32 = arith.constant 0 : i32
    return %arg0, %arg1 : i32, i32
  }
}

</mosaic_0001>

<llo_original>
// kernel: conv_bn_silu.1
$region0: #{conv_bn_silu.1}
  #allocation0 [shape = 'u32[]', space=smem, size = 0x4, offset = 0x4, fixed_abs, tag = 'smem constant byte address 0x4 - core index']
  #allocation1 [shape = 'u32[144,128]{1,0:T(1,128)}', space=vmem, size = 0x12000, scoped, tag = 'internal scratch']
  %s0 = inlined_call_operand.vmem [shape: bf16[3,32,18,4], index: 0, kind: input, shape index: {}]
  %s1 = inlined_call_operand.vmem [shape: bf16[9,4,128], index: 1, kind: input, shape index: {}]
  %s2 = inlined_call_operand.vmem [shape: f32[1,128], index: 2, kind: input, shape index: {}]
  %s3 = inlined_call_operand.vmem [shape: f32[512,128], index: 3, kind: output, shape index: {}]
  %s4 = sld [smem:[#allocation0]]
  $region86: #{conv_bn_silu.1} parent=0
    _
  %s6 = ssub.s32 1, %s4
  %s7 = scalar_select 0, %s6, %s4
  $region1: #{conv_bn_silu.1} parent=0
    #allocation2 [shape = 'u8[294912]{0}', space=vmem, size = 0x48000, scoped, tag = 'input window, operand 0']
    loop: start=0, step=1, limit=6
    $region2: #{conv_bn_silu.1} parent=1 // loop_pre_header
      _
    $region3: #{conv_bn_silu.1} parent=1 // loop_header
      %s9 = sphi 0, %s13
      %p10 = scmp.ge.s32.totalorder %s9, 6
      %s16 = sphi 0, %s28
      %s17 = sphi 0, %s24
      %s18 = sphi 0, %s16
      %s19 = sphi 0, %s17
      %s20 = sphi 0, %s18
      %s21 = sphi 0, %s19
      %s31 = sphi 0, %s33
      %s34 = sphi 0, %s31
      %s35 = sphi 0, %s34
      %s51 = sphi 0, %s35
      %s57 = sphi 0, %s59
      %s60 = sphi 0, %s57
      %s61 = sphi 0, %s60
      %s77 = sphi 0, %s61
      %s83 = sphi 0, %s85
      %s86 = sphi 0, %s83
      %s87 = sphi 0, %s86
      %s103 = sphi 0, %s87
      %s111 = sphi 0, %s113
      %s114 = sphi 0, %s111
      %s115 = sphi 0, %s114
      %s131 = sphi 0, %s115
    $region4: #{conv_bn_silu.1} parent=1 // loop_header_branch
      %12 = sbr.rel (%p10) target = $region8
    $region5: #{conv_bn_silu.1} parent=1 // loop_body
      %s14 = ssub.s32 %s9, 1
      %s15 = ssub.s32 %s9, 2
      %s22 = sadd.s32 1, %s17
      %p23 = scmp.ge.s32.totalorder %s22, 1
      %s24 = scalar_select %p23, 0, %s22
      %s25 = sadd.s32 1, %s16
      %s26 = scalar_select %p23, %s25, %s16
      %p27 = scmp.ge.s32.totalorder %s26, 4
      %s28 = scalar_select %p27, 0, %s26
      %s29 = ssub.s32 %s16, %s28
      %p30 = scmp.eq.s32.totalorder %s29, 0
      %s32 = sadd.s32 %s31, 1
      %s33 = scalar_select %p30, %s31, %s32
      %p36 = pneg %p30
      %p37 = scmp.eq.s32.totalorder %s9, 3
      %p38 = por %p36, %p37
      %p39 = scmp.ne.s32.totalorder %s31, %s34
      %p40 = scmp.eq.s32.totalorder %s9, 0
      %p41 = por %p39, %p40
      %p42 = scmp.ne.s32.totalorder %s31, %s34
      %p43 = scmp.eq.s32.totalorder %s14, 3
      %p44 = por %p42, %p43
      %p45 = scmp.ne.s32.totalorder %s34, %s35
      %p46 = scmp.eq.s32.totalorder %s14, 0
      %p47 = por %p45, %p46
      %p48 = scmp.ne.s32.totalorder %s34, %s35
      %p49 = scmp.eq.s32.totalorder %s15, 3
      %p50 = por %p48, %p49
      %p52 = scmp.ne.s32.totalorder %s35, %s51
      %p53 = scmp.eq.s32.totalorder %s15, 0
      %p54 = por %p52, %p53
      %s55 = ssub.s32 %s17, %s24
      %p56 = scmp.eq.s32.totalorder %s55, 0
      %s58 = sadd.s32 %s57, 1
      %s59 = scalar_select %p56, %s57, %s58
      %p62 = pneg %p56
      %p63 = scmp.eq.s32.totalorder %s9, 3
      %p64 = por %p62, %p63
      %p65 = scmp.ne.s32.totalorder %s57, %s60
      %p66 = scmp.eq.s32.totalorder %s9, 0
      %p67 = por %p65, %p66
      %p68 = scmp.ne.s32.totalorder %s57, %s60
      %p69 = scmp.eq.s32.totalorder %s14, 3
      %p70 = por %p68, %p69
      %p71 = scmp.ne.s32.totalorder %s60, %s61
      %p72 = scmp.eq.s32.totalorder %s14, 0
      %p73 = por %p71, %p72
      %p74 = scmp.ne.s32.totalorder %s60, %s61
      %p75 = scmp.eq.s32.totalorder %s15, 3
      %p76 = por %p74, %p75
      %p78 = scmp.ne.s32.totalorder %s61, %s77
      %p79 = scmp.eq.s32.totalorder %s15, 0
      %p80 = por %p78, %p79
      %s81 = ssub.s32 %s17, %s24
      %p82 = scmp.eq.s32.totalorder %s81, 0
      %s84 = sadd.s32 %s83, 1
      %s85 = scalar_select %p82, %s83, %s84
      %p88 = pneg %p82
      %p89 = scmp.eq.s32.totalorder %s9, 3
      %p90 = por %p88, %p89
      %p91 = scmp.ne.s32.totalorder %s83, %s86
      %p92 = scmp.eq.s32.totalorder %s9, 0
      %p93 = por %p91, %p92
      %p94 = scmp.ne.s32.totalorder %s83, %s86
      %p95 = scmp.eq.s32.totalorder %s14, 3
      %p96 = por %p94, %p95
      %p97 = scmp.ne.s32.totalorder %s86, %s87
      %p98 = scmp.eq.s32.totalorder %s14, 0
      %p99 = por %p97, %p98
      %p100 = scmp.ne.s32.totalorder %s86, %s87
      %p101 = scmp.eq.s32.totalorder %s15, 3
      %p102 = por %p100, %p101
      %p104 = scmp.ne.s32.totalorder %s87, %s103
      %p105 = scmp.eq.s32.totalorder %s15, 0
      %p106 = por %p104, %p105
      %s107 = ssub.s32 %s16, %s28
      %s108 = ssub.s32 %s17, %s24
      %s109 = sor.u32 %s107, %s108
      %p110 = scmp.eq.s32.totalorder %s109, 0
      %s112 = sadd.s32 %s111, 1
      %s113 = scalar_select %p110, %s111, %s112
      %p116 = pneg %p110
      %p117 = scmp.eq.s32.totalorder %s9, 3
      %p118 = por %p116, %p117
      %p119 = scmp.ne.s32.totalorder %s111, %s114
      %p120 = scmp.eq.s32.totalorder %s9, 0
      %p121 = por %p119, %p120
      %p122 = scmp.ne.s32.totalorder %s111, %s114
      %p123 = scmp.eq.s32.totalorder %s14, 3
      %p124 = por %p122, %p123
      %p125 = scmp.ne.s32.totalorder %s114, %s115
      %p126 = scmp.eq.s32.totalorder %s14, 0
      %p127 = por %p125, %p126
      %p128 = scmp.ne.s32.totalorder %s114, %s115
      %p129 = scmp.eq.s32.totalorder %s15, 3
      %p130 = por %p128, %p129
      %p132 = scmp.ne.s32.totalorder %s115, %s131
      %p133 = scmp.eq.s32.totalorder %s15, 0
      %p134 = por %p132, %p133
      %p135 = scmp.le.s32.totalorder 1, %s9
      %p136 = scmp.lt.s32.totalorder %s9, 5
      %p137 = pnand %p135, %p136
      %p138 = pneg %p137
      // Predicated region
      $region9: #{conv_bn_silu.1} parent=5 // pred_check
        _
      $region10: #{conv_bn_silu.1} parent=5 // pred_check_branch
        %140 = sbr.rel (%p137) target = $region12
      $region11: #{conv_bn_silu.1} parent=5 // pred_region
        %s141 = ssub.s32 %s9, 1
        // Predicated region
        $region13: #{conv_bn_silu.1} parent=11 // pred_check
          %p142 = pneg %p73
        $region14: #{conv_bn_silu.1} parent=11 // pred_check_branch
          %144 = sbr.rel (%p142) target = $region16
        $region15: #{conv_bn_silu.1} parent=11 // pred_region
          %p145 = scmp.lt.s32.totalorder %s19, 0
          %s146 = scalar_select %p145, %s19, 0
          %s147 = smul.addr %s146, 2
          %s148 = scalar_lea.vmem %s1, %s147
        $region16: #{conv_bn_silu.1} parent=11 // pred_fallthru
          _
        // Predicated region
        $region17: #{conv_bn_silu.1} parent=11 // pred_check
          %p149 = pneg %p99
        $region18: #{conv_bn_silu.1} parent=11 // pred_check_branch
          %151 = sbr.rel (%p149) target = $region20
        $region19: #{conv_bn_silu.1} parent=11 // pred_region
          %p152 = scmp.lt.s32.totalorder %s19, 0
          %s153 = scalar_select %p152, %s19, 0
          %s154 = scalar_lea.vmem %s2, %s153
        $region20: #{conv_bn_silu.1} parent=11 // pred_fallthru
          _
      $region12: #{conv_bn_silu.1} parent=5 // pred_fallthru
        _
      %p155 = scmp.lt.s32.totalorder %s9, 4
      // Predicated region
      $region21: #{conv_bn_silu.1} parent=5 // pred_check
        %p156 = pneg %p155
      $region22: #{conv_bn_silu.1} parent=5 // pred_check_branch
        %158 = sbr.rel (%p156) target = $region24
      $region23: #{conv_bn_silu.1} parent=5 // pred_region
        // Predicated region
        $region25: #{conv_bn_silu.1} parent=23 // pred_check
          %p159 = pneg %p41
        $region26: #{conv_bn_silu.1} parent=23 // pred_check_branch
          %161 = sbr.rel (%p159) target = $region28
        $region27: #{conv_bn_silu.1} parent=23 // pred_region
          %s162 = sand.u32 %s31, 1
          %s163 = sand.u32 %s31, 1
          %s164 = smul.addr %s163, 288
          %s165 = scalar_lea.vmem [#allocation2], %s164
          %s166 = smul.u32 8, %s16
          %s167 = smul.addr %s166, 3
          %s168 = smul.addr %s167, 4
          %s169 = scalar_lea.vmem %s0, %s168
          // Predicated region
          $region29: #{conv_bn_silu.1} parent=27 // pred_check
            _
          $region30: #{conv_bn_silu.1} parent=27 // pred_check_branch
            %171 = sbr.rel (0) target = $region32
          $region31: #{conv_bn_silu.1} parent=27 // pred_region
            // Predicated region
            $region33: #{conv_bn_silu.1} parent=31 // pred_check
              _
            $region34: #{conv_bn_silu.1} parent=31 // pred_check_branch
              %173 = sbr.rel target = $region36
            $region35: #{conv_bn_silu.1} parent=31 // pred_region
              // Predicated region
              $region48: #{conv_bn_silu.1} parent=35 // pred_check
                _
              $region49: #{conv_bn_silu.1} parent=35 // pred_check_branch
                %331 = sbr.rel (0) target = $region51
              $region50: #{conv_bn_silu.1} parent=35 // pred_region
                loop: start=0, step=1, limit=1
                $region52: #{conv_bn_silu.1} parent=50 // loop_pre_header
                  _
                $region53: #{conv_bn_silu.1} parent=50 // loop_header
                  %s333 = sphi 0, %s337
                  %p334 = scmp.ge.s32.totalorder %s333, 1
                  %s338 = sphi %s169, %s169
                  %s339 = sphi %s165, %s165
                $region54: #{conv_bn_silu.1} parent=50 // loop_header_branch
                  %336 = sbr.rel (%p334) target = $region58
                $region55: #{conv_bn_silu.1} parent=50 // loop_body
                  _
                $region56: #{conv_bn_silu.1} parent=50 // loop_footer
                  %s337 = sadd.s32 1, %s333
                $region57: #{conv_bn_silu.1} parent=50 // loop_footer_branch
                  %332 = sbr.rel target = $region53
                $region58: #{conv_bn_silu.1} parent=50 // loop_exit
                  _
                %s341 = ssub.s32 16, 1
                loop: start=0, step=1, limit=1
                $region59: #{conv_bn_silu.1} parent=50 // loop_pre_header
                  _
                $region60: #{conv_bn_silu.1} parent=50 // loop_header
                  %s343 = sphi 0, %s347
                  %p344 = scmp.ge.s32.totalorder %s343, 1
                  %s348 = sphi %s169, %s169
                  %s349 = sphi %s165, %s165
                $region61: #{conv_bn_silu.1} parent=50 // loop_header_branch
                  %346 = sbr.rel (%p344) target = $region65
                $region62: #{conv_bn_silu.1} parent=50 // loop_body
                  %v350 = vld [vmem:[%s348] sm:%s341]
                  %351 = vst [vmem:[%s349] sm:%s341] %v350
                  %v352 = vld [vmem:[%s348 + $0x4] sm:%s341]
                  %353 = vst [vmem:[%s349 + $0x4] sm:%s341] %v352
                  %v354 = vld [vmem:[%s348 + $0x8] sm:%s341]
                  %355 = vst [vmem:[%s349 + $0x8] sm:%s341] %v354
                  %v356 = vld [vmem:[%s348 + $0xc] sm:%s341]
                  %357 = vst [vmem:[%s349 + $0xc] sm:%s341] %v356
                  %v358 = vld [vmem:[%s348 + $0x10] sm:%s341]
                  %359 = vst [vmem:[%s349 + $0x10] sm:%s341] %v358
                  %v360 = vld [vmem:[%s348 + $0x14] sm:%s341]
                  %361 = vst [vmem:[%s349 + $0x14] sm:%s341] %v360
                  %v362 = vld [vmem:[%s348 + $0x18] sm:%s341]
                  %363 = vst [vmem:[%s349 + $0x18] sm:%s341] %v362
                  %v364 = vld [vmem:[%s348 + $0x1c] sm:%s341]
                  %365 = vst [vmem:[%s349 + $0x1c] sm:%s341] %v364
                  %v366 = vld [vmem:[%s348 + $0x20] sm:%s341]
                  %367 = vst [vmem:[%s349 + $0x20] sm:%s341] %v366
                  %v368 = vld [vmem:[%s348 + $0x24] sm:%s341]
                  %369 = vst [vmem:[%s349 + $0x24] sm:%s341] %v368
                  %v370 = vld [vmem:[%s348 + $0x28] sm:%s341]
                  %371 = vst [vmem:[%s349 + $0x28] sm:%s341] %v370
                  %v372 = vld [vmem:[%s348 + $0x2c] sm:%s341]
                  %373 = vst [vmem:[%s349 + $0x2c] sm:%s341] %v372
                  %v374 = vld [vmem:[%s348 + $0x30] sm:%s341]
                  %375 = vst [vmem:[%s349 + $0x30] sm:%s341] %v374
                  %v376 = vld [vmem:[%s348 + $0x34] sm:%s341]
                  %377 = vst [vmem:[%s349 + $0x34] sm:%s341] %v376
                  %v378 = vld [vmem:[%s348 + $0x38] sm:%s341]
                  %379 = vst [vmem:[%s349 + $0x38] sm:%s341] %v378
                  %v380 = vld [vmem:[%s348 + $0x3c] sm:%s341]
                  %381 = vst [vmem:[%s349 + $0x3c] sm:%s341] %v380
                  %v382 = vld [vmem:[%s348 + $0x40] sm:%s341]
                  %383 = vst [vmem:[%s349 + $0x40] sm:%s341] %v382
                  %v384 = vld [vmem:[%s348 + $0x44] sm:%s341]
                  %385 = vst [vmem:[%s349 + $0x44] sm:%s341] %v384
                  %v386 = vld [vmem:[%s348 + $0x48] sm:%s341]
                  %387 = vst [vmem:[%s349 + $0x48] sm:%s341] %v386
                  %v388 = vld [vmem:[%s348 + $0x4c] sm:%s341]
                  %389 = vst [vmem:[%s349 + $0x4c] sm:%s341] %v388
                  %v390 = vld [vmem:[%s348 + $0x50] sm:%s341]
                  %391 = vst [vmem:[%s349 + $0x50] sm:%s341] %v390
                  %v392 = vld [vmem:[%s348 + $0x54] sm:%s341]
                  %393 = vst [vmem:[%s349 + $0x54] sm:%s341] %v392
                  %v394 = vld [vmem:[%s348 + $0x58] sm:%s341]
                  %395 = vst [vmem:[%s349 + $0x58] sm:%s341] %v394
                  %v396 = vld [vmem:[%s348 + $0x5c] sm:%s341]
                  %397 = vst [vmem:[%s349 + $0x5c] sm:%s341] %v396
                  %v398 = vld [vmem:[%s348 + $0x180] sm:%s341]
                  %399 = vst [vmem:[%s349 + $0x60] sm:%s341] %v398
                  %v400 = vld [vmem:[%s348 + $0x184] sm:%s341]
                  %401 = vst [vmem:[%s349 + $0x64] sm:%s341] %v400
                  %v402 = vld [vmem:[%s348 + $0x188] sm:%s341]
                  %403 = vst [vmem:[%s349 + $0x68] sm:%s341] %v402
                  %v404 = vld [vmem:[%s348 + $0x18c] sm:%s341]
                  %405 = vst [vmem:[%s349 + $0x6c] sm:%s341] %v404
                  %v406 = vld [vmem:[%s348 + $0x190] sm:%s341]
                  %407 = vst [vmem:[%s349 + $0x70] sm:%s341] %v406
                  %v408 = vld [vmem:[%s348 + $0x194] sm:%s341]
                  %409 = vst [vmem:[%s349 + $0x74] sm:%s341] %v408
                  %v410 = vld [vmem:[%s348 + $0x198] sm:%s341]
                  %411 = vst [vmem:[%s349 + $0x78] sm:%s341] %v410
                  %v412 = vld [vmem:[%s348 + $0x19c] sm:%s341]
                  %413 = vst [vmem:[%s349 + $0x7c] sm:%s341] %v412
                  %v414 = vld [vmem:[%s348 + $0x1a0] sm:%s341]
                  %415 = vst [vmem:[%s349 + $0x80] sm:%s341] %v414
                  %v416 = vld [vmem:[%s348 + $0x1a4] sm:%s341]
                  %417 = vst [vmem:[%s349 + $0x84] sm:%s341] %v416
                  %v418 = vld [vmem:[%s348 + $0x1a8] sm:%s341]
                  %419 = vst [vmem:[%s349 + $0x88] sm:%s341] %v418
                  %v420 = vld [vmem:[%s348 + $0x1ac] sm:%s341]
                  %421 = vst [vmem:[%s349 + $0x8c] sm:%s341] %v420
                  %v422 = vld [vmem:[%s348 + $0x1b0] sm:%s341]
                  %423 = vst [vmem:[%s349 + $0x90] sm:%s341] %v422
                  %v424 = vld [vmem:[%s348 + $0x1b4] sm:%s341]
                  %425 = vst [vmem:[%s349 + $0x94] sm:%s341] %v424
                  %v426 = vld [vmem:[%s348 + $0x1b8] sm:%s341]
                  %427 = vst [vmem:[%s349 + $0x98] sm:%s341] %v426
                  %v428 = vld [vmem:[%s348 + $0x1bc] sm:%s341]
                  %429 = vst [vmem:[%s349 + $0x9c] sm:%s341] %v428
                  %v430 = vld [vmem:[%s348 + $0x1c0] sm:%s341]
                  %431 = vst [vmem:[%s349 + $0xa0] sm:%s341] %v430
                  %v432 = vld [vmem:[%s348 + $0x1c4] sm:%s341]
                  %433 = vst [vmem:[%s349 + $0xa4] sm:%s341] %v432
                  %v434 = vld [vmem:[%s348 + $0x1c8] sm:%s341]
                  %435 = vst [vmem:[%s349 + $0xa8] sm:%s341] %v434
                  %v436 = vld [vmem:[%s348 + $0x1cc] sm:%s341]
                  %437 = vst [vmem:[%s349 + $0xac] sm:%s341] %v436
                  %v438 = vld [vmem:[%s348 + $0x1d0] sm:%s341]
                  %439 = vst [vmem:[%s349 + $0xb0] sm:%s341] %v438
                  %v440 = vld [vmem:[%s348 + $0x1d4] sm:%s341]
                  %441 = vst [vmem:[%s349 + $0xb4] sm:%s341] %v440
                  %v442 = vld [vmem:[%s348 + $0x1d8] sm:%s341]
                  %443 = vst [vmem:[%s349 + $0xb8] sm:%s341] %v442
                  %v444 = vld [vmem:[%s348 + $0x1dc] sm:%s341]
                  %445 = vst [vmem:[%s349 + $0xbc] sm:%s341] %v444
                  %v446 = vld [vmem:[%s348 + $0x300] sm:%s341]
                  %447 = vst [vmem:[%s349 + $0xc0] sm:%s341] %v446
                  %v448 = vld [vmem:[%s348 + $0x304] sm:%s341]
                  %449 = vst [vmem:[%s349 + $0xc4] sm:%s341] %v448
                  %v450 = vld [vmem:[%s348 + $0x308] sm:%s341]
                  %451 = vst [vmem:[%s349 + $0xc8] sm:%s341] %v450
                  %v452 = vld [vmem:[%s348 + $0x30c] sm:%s341]
                  %453 = vst [vmem:[%s349 + $0xcc] sm:%s341] %v452
                  %v454 = vld [vmem:[%s348 + $0x310] sm:%s341]
                  %455 = vst [vmem:[%s349 + $0xd0] sm:%s341] %v454
                  %v456 = vld [vmem:[%s348 + $0x314] sm:%s341]
                  %457 = vst [vmem:[%s349 + $0xd4] sm:%s341] %v456
                  %v458 = vld [vmem:[%s348 + $0x318] sm:%s341]
                  %459 = vst [vmem:[%s349 + $0xd8] sm:%s341] %v458
                  %v460 = vld [vmem:[%s348 + $0x31c] sm:%s341]
                  %461 = vst [vmem:[%s349 + $0xdc] sm:%s341] %v460
                  %v462 = vld [vmem:[%s348 + $0x320] sm:%s341]
                  %463 = vst [vmem:[%s349 + $0xe0] sm:%s341] %v462
                  %v464 = vld [vmem:[%s348 + $0x324] sm:%s341]
                  %465 = vst [vmem:[%s349 + $0xe4] sm:%s341] %v464
                  %v466 = vld [vmem:[%s348 + $0x328] sm:%s341]
                  %467 = vst [vmem:[%s349 + $0xe8] sm:%s341] %v466
                  %v468 = vld [vmem:[%s348 + $0x32c] sm:%s341]
                  %469 = vst [vmem:[%s349 + $0xec] sm:%s341] %v468
                  %v470 = vld [vmem:[%s348 + $0x330] sm:%s341]
                  %471 = vst [vmem:[%s349 + $0xf0] sm:%s341] %v470
                  %v472 = vld [vmem:[%s348 + $0x334] sm:%s341]
                  %473 = vst [vmem:[%s349 + $0xf4] sm:%s341] %v472
                  %v474 = vld [vmem:[%s348 + $0x338] sm:%s341]
                  %475 = vst [vmem:[%s349 + $0xf8] sm:%s341] %v474
                  %v476 = vld [vmem:[%s348 + $0x33c] sm:%s341]
                  %477 = vst [vmem:[%s349 + $0xfc] sm:%s341] %v476
                  %v478 = vld [vmem:[%s348 + $0x340] sm:%s341]
                  %479 = vst [vmem:[%s349 + $0x100] sm:%s341] %v478
                  %v480 = vld [vmem:[%s348 + $0x344] sm:%s341]
                  %481 = vst [vmem:[%s349 + $0x104] sm:%s341] %v480
                  %v482 = vld [vmem:[%s348 + $0x348] sm:%s341]
                  %483 = vst [vmem:[%s349 + $0x108] sm:%s341] %v482
                  %v484 = vld [vmem:[%s348 + $0x34c] sm:%s341]
                  %485 = vst [vmem:[%s349 + $0x10c] sm:%s341] %v484
                  %v486 = vld [vmem:[%s348 + $0x350] sm:%s341]
                  %487 = vst [vmem:[%s349 + $0x110] sm:%s341] %v486
                  %v488 = vld [vmem:[%s348 + $0x354] sm:%s341]
                  %489 = vst [vmem:[%s349 + $0x114] sm:%s341] %v488
                  %v490 = vld [vmem:[%s348 + $0x358] sm:%s341]
                  %491 = vst [vmem:[%s349 + $0x118] sm:%s341] %v490
                  %v492 = vld [vmem:[%s348 + $0x35c] sm:%s341]
                  %493 = vst [vmem:[%s349 + $0x11c] sm:%s341] %v492
                $region63: #{conv_bn_silu.1} parent=50 // loop_footer
                  %s347 = sadd.s32 1, %s343
                $region64: #{conv_bn_silu.1} parent=50 // loop_footer_branch
                  %342 = sbr.rel target = $region60
                $region65: #{conv_bn_silu.1} parent=50 // loop_exit
                  _
              $region51: #{conv_bn_silu.1} parent=35 // pred_fallthru
                _
            $region36: #{conv_bn_silu.1} parent=31 // pred_fallthru
              _
            // Predicated region
            $region37: #{conv_bn_silu.1} parent=31 // pred_check
              _
            $region38: #{conv_bn_silu.1} parent=31 // pred_check_branch
              %175 = sbr.rel (0) target = $region40
            $region39: #{conv_bn_silu.1} parent=31 // pred_region
              %s177 = ssub.s32 16, 1
              loop: start=0, step=1, limit=1
              $region41: #{conv_bn_silu.1} parent=39 // loop_pre_header
                _
              $region42: #{conv_bn_silu.1} parent=39 // loop_header
                %s179 = sphi 0, %s183
                %p180 = scmp.ge.s32.totalorder %s179, 1
                %s184 = sphi %s169, %s169
                %s185 = sphi %s165, %s165
              $region43: #{conv_bn_silu.1} parent=39 // loop_header_branch
                %182 = sbr.rel (%p180) target = $region47
              $region44: #{conv_bn_silu.1} parent=39 // loop_body
                %v186 = vld [vmem:[%s184] sm:%s177]
                %187 = vst [vmem:[%s185] sm:%s177] %v186
                %v188 = vld [vmem:[%s184 + $0x4] sm:%s177]
                %189 = vst [vmem:[%s185 + $0x4] sm:%s177] %v188
                %v190 = vld [vmem:[%s184 + $0x8] sm:%s177]
                %191 = vst [vmem:[%s185 + $0x8] sm:%s177] %v190
                %v192 = vld [vmem:[%s184 + $0xc] sm:%s177]
                %193 = vst [vmem:[%s185 + $0xc] sm:%s177] %v192
                %v194 = vld [vmem:[%s184 + $0x10] sm:%s177]
                %195 = vst [vmem:[%s185 + $0x10] sm:%s177] %v194
                %v196 = vld [vmem:[%s184 + $0x14] sm:%s177]
                %197 = vst [vmem:[%s185 + $0x14] sm:%s177] %v196
                %v198 = vld [vmem:[%s184 + $0x18] sm:%s177]
                %199 = vst [vmem:[%s185 + $0x18] sm:%s177] %v198
                %v200 = vld [vmem:[%s184 + $0x1c] sm:%s177]
                %201 = vst [vmem:[%s185 + $0x1c] sm:%s177] %v200
                %v202 = vld [vmem:[%s184 + $0x20] sm:%s177]
                %203 = vst [vmem:[%s185 + $0x20] sm:%s177] %v202
                %v204 = vld [vmem:[%s184 + $0x24] sm:%s177]
                %205 = vst [vmem:[%s185 + $0x24] sm:%s177] %v204
                %v206 = vld [vmem:[%s184 + $0x28] sm:%s177]
                %207 = vst [vmem:[%s185 + $0x28] sm:%s177] %v206
                %v208 = vld [vmem:[%s184 + $0x2c] sm:%s177]
                %209 = vst [vmem:[%s185 + $0x2c] sm:%s177] %v208
                %v210 = vld [vmem:[%s184 + $0x30] sm:%s177]
                %211 = vst [vmem:[%s185 + $0x30] sm:%s177] %v210
                %v212 = vld [vmem:[%s184 + $0x34] sm:%s177]
                %213 = vst [vmem:[%s185 + $0x34] sm:%s177] %v212
                %v214 = vld [vmem:[%s184 + $0x38] sm:%s177]
                %215 = vst [vmem:[%s185 + $0x38] sm:%s177] %v214
                %v216 = vld [vmem:[%s184 + $0x3c] sm:%s177]
                %217 = vst [vmem:[%s185 + $0x3c] sm:%s177] %v216
                %v218 = vld [vmem:[%s184 + $0x40] sm:%s177]
                %219 = vst [vmem:[%s185 + $0x40] sm:%s177] %v218
                %v220 = vld [vmem:[%s184 + $0x44] sm:%s177]
                %221 = vst [vmem:[%s185 + $0x44] sm:%s177] %v220
                %v222 = vld [vmem:[%s184 + $0x48] sm:%s177]
                %223 = vst [vmem:[%s185 + $0x48] sm:%s177] %v222
                %v224 = vld [vmem:[%s184 + $0x4c] sm:%s177]
                %225 = vst [vmem:[%s185 + $0x4c] sm:%s177] %v224
                %v226 = vld [vmem:[%s184 + $0x50] sm:%s177]
                %227 = vst [vmem:[%s185 + $0x50] sm:%s177] %v226
                %v228 = vld [vmem:[%s184 + $0x54] sm:%s177]
                %229 = vst [vmem:[%s185 + $0x54] sm:%s177] %v228
                %v230 = vld [vmem:[%s184 + $0x58] sm:%s177]
                %231 = vst [vmem:[%s185 + $0x58] sm:%s177] %v230
                %v232 = vld [vmem:[%s184 + $0x5c] sm:%s177]
                %233 = vst [vmem:[%s185 + $0x5c] sm:%s177] %v232
                %v234 = vld [vmem:[%s184 + $0x180] sm:%s177]
                %235 = vst [vmem:[%s185 + $0x60] sm:%s177] %v234
                %v236 = vld [vmem:[%s184 + $0x184] sm:%s177]
                %237 = vst [vmem:[%s185 + $0x64] sm:%s177] %v236
                %v238 = vld [vmem:[%s184 + $0x188] sm:%s177]
                %239 = vst [vmem:[%s185 + $0x68] sm:%s177] %v238
                %v240 = vld [vmem:[%s184 + $0x18c] sm:%s177]
                %241 = vst [vmem:[%s185 + $0x6c] sm:%s177] %v240
                %v242 = vld [vmem:[%s184 + $0x190] sm:%s177]
                %243 = vst [vmem:[%s185 + $0x70] sm:%s177] %v242
                %v244 = vld [vmem:[%s184 + $0x194] sm:%s177]
                %245 = vst [vmem:[%s185 + $0x74] sm:%s177] %v244
                %v246 = vld [vmem:[%s184 + $0x198] sm:%s177]
                %247 = vst [vmem:[%s185 + $0x78] sm:%s177] %v246
                %v248 = vld [vmem:[%s184 + $0x19c] sm:%s177]
                %249 = vst [vmem:[%s185 + $0x7c] sm:%s177] %v248
                %v250 = vld [vmem:[%s184 + $0x1a0] sm:%s177]
                %251 = vst [vmem:[%s185 + $0x80] sm:%s177] %v250
                %v252 = vld [vmem:[%s184 + $0x1a4] sm:%s177]
                %253 = vst [vmem:[%s185 + $0x84] sm:%s177] %v252
                %v254 = vld [vmem:[%s184 + $0x1a8] sm:%s177]
                %255 = vst [vmem:[%s185 + $0x88] sm:%s177] %v254
                %v256 = vld [vmem:[%s184 + $0x1ac] sm:%s177]
                %257 = vst [vmem:[%s185 + $0x8c] sm:%s177] %v256
                %v258 = vld [vmem:[%s184 + $0x1b0] sm:%s177]
                %259 = vst [vmem:[%s185 + $0x90] sm:%s177] %v258
                %v260 = vld [vmem:[%s184 + $0x1b4] sm:%s177]
                %261 = vst [vmem:[%s185 + $0x94] sm:%s177] %v260
                %v262 = vld [vmem:[%s184 + $0x1b8] sm:%s177]
                %263 = vst [vmem:[%s185 + $0x98] sm:%s177] %v262
                %v264 = vld [vmem:[%s184 + $0x1bc] sm:%s177]
                %265 = vst [vmem:[%s185 + $0x9c] sm:%s177] %v264
                %v266 = vld [vmem:[%s184 + $0x1c0] sm:%s177]
                %267 = vst [vmem:[%s185 + $0xa0] sm:%s177] %v266
                %v268 = vld [vmem:[%s184 + $0x1c4] sm:%s177]
                %269 = vst [vmem:[%s185 + $0xa4] sm:%s177] %v268
                %v270 = vld [vmem:[%s184 + $0x1c8] sm:%s177]
                %271 = vst [vmem:[%s185 + $0xa8] sm:%s177] %v270
                %v272 = vld [vmem:[%s184 + $0x1cc] sm:%s177]
                %273 = vst [vmem:[%s185 + $0xac] sm:%s177] %v272
                %v274 = vld [vmem:[%s184 + $0x1d0] sm:%s177]
                %275 = vst [vmem:[%s185 + $0xb0] sm:%s177] %v274
                %v276 = vld [vmem:[%s184 + $0x1d4] sm:%s177]
                %277 = vst [vmem:[%s185 + $0xb4] sm:%s177] %v276
                %v278 = vld [vmem:[%s184 + $0x1d8] sm:%s177]
                %279 = vst [vmem:[%s185 + $0xb8] sm:%s177] %v278
                %v280 = vld [vmem:[%s184 + $0x1dc] sm:%s177]
                %281 = vst [vmem:[%s185 + $0xbc] sm:%s177] %v280
                %v282 = vld [vmem:[%s184 + $0x300] sm:%s177]
                %283 = vst [vmem:[%s185 + $0xc0] sm:%s177] %v282
                %v284 = vld [vmem:[%s184 + $0x304] sm:%s177]
                %285 = vst [vmem:[%s185 + $0xc4] sm:%s177] %v284
                %v286 = vld [vmem:[%s184 + $0x308] sm:%s177]
                %287 = vst [vmem:[%s185 + $0xc8] sm:%s177] %v286
                %v288 = vld [vmem:[%s184 + $0x30c] sm:%s177]
                %289 = vst [vmem:[%s185 + $0xcc] sm:%s177] %v288
                %v290 = vld [vmem:[%s184 + $0x310] sm:%s177]
                %291 = vst [vmem:[%s185 + $0xd0] sm:%s177] %v290
                %v292 = vld [vmem:[%s184 + $0x314] sm:%s177]
                %293 = vst [vmem:[%s185 + $0xd4] sm:%s177] %v292
                %v294 = vld [vmem:[%s184 + $0x318] sm:%s177]
                %295 = vst [vmem:[%s185 + $0xd8] sm:%s177] %v294
                %v296 = vld [vmem:[%s184 + $0x31c] sm:%s177]
                %297 = vst [vmem:[%s185 + $0xdc] sm:%s177] %v296
                %v298 = vld [vmem:[%s184 + $0x320] sm:%s177]
                %299 = vst [vmem:[%s185 + $0xe0] sm:%s177] %v298
                %v300 = vld [vmem:[%s184 + $0x324] sm:%s177]
                %301 = vst [vmem:[%s185 + $0xe4] sm:%s177] %v300
                %v302 = vld [vmem:[%s184 + $0x328] sm:%s177]
                %303 = vst [vmem:[%s185 + $0xe8] sm:%s177] %v302
                %v304 = vld [vmem:[%s184 + $0x32c] sm:%s177]
                %305 = vst [vmem:[%s185 + $0xec] sm:%s177] %v304
                %v306 = vld [vmem:[%s184 + $0x330] sm:%s177]
                %307 = vst [vmem:[%s185 + $0xf0] sm:%s177] %v306
                %v308 = vld [vmem:[%s184 + $0x334] sm:%s177]
                %309 = vst [vmem:[%s185 + $0xf4] sm:%s177] %v308
                %v310 = vld [vmem:[%s184 + $0x338] sm:%s177]
                %311 = vst [vmem:[%s185 + $0xf8] sm:%s177] %v310
                %v312 = vld [vmem:[%s184 + $0x33c] sm:%s177]
                %313 = vst [vmem:[%s185 + $0xfc] sm:%s177] %v312
                %v314 = vld [vmem:[%s184 + $0x340] sm:%s177]
                %315 = vst [vmem:[%s185 + $0x100] sm:%s177] %v314
                %v316 = vld [vmem:[%s184 + $0x344] sm:%s177]
                %317 = vst [vmem:[%s185 + $0x104] sm:%s177] %v316
                %v318 = vld [vmem:[%s184 + $0x348] sm:%s177]
                %319 = vst [vmem:[%s185 + $0x108] sm:%s177] %v318
                %v320 = vld [vmem:[%s184 + $0x34c] sm:%s177]
                %321 = vst [vmem:[%s185 + $0x10c] sm:%s177] %v320
                %v322 = vld [vmem:[%s184 + $0x350] sm:%s177]
                %323 = vst [vmem:[%s185 + $0x110] sm:%s177] %v322
                %v324 = vld [vmem:[%s184 + $0x354] sm:%s177]
                %325 = vst [vmem:[%s185 + $0x114] sm:%s177] %v324
                %v326 = vld [vmem:[%s184 + $0x358] sm:%s177]
                %327 = vst [vmem:[%s185 + $0x118] sm:%s177] %v326
                %v328 = vld [vmem:[%s184 + $0x35c] sm:%s177]
                %329 = vst [vmem:[%s185 + $0x11c] sm:%s177] %v328
              $region45: #{conv_bn_silu.1} parent=39 // loop_footer
                %s183 = sadd.s32 1, %s179
              $region46: #{conv_bn_silu.1} parent=39 // loop_footer_branch
                %178 = sbr.rel target = $region42
              $region47: #{conv_bn_silu.1} parent=39 // loop_exit
                _
            $region40: #{conv_bn_silu.1} parent=31 // pred_fallthru
              _
          $region32: #{conv_bn_silu.1} parent=27 // pred_fallthru
            _
          %494 = vnop
        $region28: #{conv_bn_silu.1} parent=23 // pred_fallthru
          _
      $region24: #{conv_bn_silu.1} parent=5 // pred_fallthru
        _
      %p495 = scmp.le.s32.totalorder 1, %s9
      %p496 = scmp.lt.s32.totalorder %s9, 5
      %p497 = pnand %p495, %p496
      %p498 = pneg %p497
      // Predicated region
      $region66: #{conv_bn_silu.1} parent=5 // pred_check
        _
      $region67: #{conv_bn_silu.1} parent=5 // pred_check_branch
        %500 = sbr.rel (%p497) target = $region69
      $region68: #{conv_bn_silu.1} parent=5 // pred_region
        %s501 = ssub.s32 %s9, 1
        %s502 = sand.u32 %s34, 1
        %s503 = sand.u32 %s34, 1
        %s504 = smul.addr %s503, 288
        %s505 = scalar_lea.vmem [#allocation2], %s504
        // Predicated region
        $region70: #{conv_bn_silu.1} parent=68 // pred_check
          %p506 = pneg %p47
        $region71: #{conv_bn_silu.1} parent=68 // pred_check_branch
          %508 = sbr.rel (%p506) target = $region73
        $region72: #{conv_bn_silu.1} parent=68 // pred_region
          _
        $region73: #{conv_bn_silu.1} parent=68 // pred_fallthru
          _
        %s509 = sand.u32 %s34, 1
        %s510 = sand.u32 %s34, 1
        %s511 = smul.addr %s510, 288
        %s512 = scalar_lea.vmem [#allocation2], %s511
        %p513 = pneg %p47
        %p514 = pneg %p44
        %p515 = scmp.lt.s32.totalorder %s19, 0
        %s516 = scalar_select %p515, %s19, 0
        %s517 = smul.addr %s516, 2
        %s518 = scalar_lea.vmem %s1, %s517
        %p519 = pneg %p73
        %p520 = pneg %p70
        %p521 = scmp.lt.s32.totalorder %s19, 0
        %s522 = scalar_select %p521, %s19, 0
        %s523 = scalar_lea.vmem %s2, %s522
        %p524 = pneg %p99
        %p525 = pneg %p96
        %p526 = pneg %p127
        %p527 = pneg %p124
        %s528 = smul.u32 16, %s18
        %p529 = scmp.lt.s32.totalorder %s528, 63
        %s530 = scalar_select %p529, %s528, 63
        %p531 = scmp.lt.s32.totalorder %s19, 0
        %s532 = scalar_select %p531, %s19, 0
        %s533 = sadd.s32 %s532, %s530
        %s534 = smul.addr %s533, 8
        %s535 = scalar_lea.vmem %s3, %s534
        %s536 = smul.u32 8, %s18
        %p537 = scmp.lt.s32.totalorder %s19, 0
        %s538 = scalar_select %p537, %s19, 0
        %s539 = smul.addr %s538, 2
        %s540 = scalar_lea.vmem %s1, %s539
        %p541 = scmp.lt.s32.totalorder %s19, 0
        %s542 = scalar_select %p541, %s19, 0
        %s543 = scalar_lea.vmem %s2, %s542
        %s544 = smul.u32 16, %s18
        %p545 = scmp.lt.s32.totalorder %s544, 63
        %s546 = scalar_select %p545, %s544, 63
        %p547 = scmp.lt.s32.totalorder %s19, 0
        %s548 = scalar_select %p547, %s19, 0
        %s549 = sadd.s32 %s548, %s546
        %s550 = smul.addr %s549, 8
        %s551 = scalar_lea.vmem %s3, %s550
        %s552 = smul.u32 16, %s18
        %v554 = vld [vmem:[%s505] sm:$0xf]
        %v555 = vld [vmem:[%s505 + $0x4] sm:$0xf]
        %v556 = vld [vmem:[%s505 + $0x8] sm:$0x1]
        %v557 = vld [vmem:[%s505 + $0xc] sm:$0xf]
        %v558 = vld [vmem:[%s505 + $0x10] sm:$0xf]
        %v559 = vld [vmem:[%s505 + $0x14] sm:$0x1]
        %v560 = vld [vmem:[%s505 + $0x18] sm:$0xf]
        %v561 = vld [vmem:[%s505 + $0x1c] sm:$0xf]
        %v562 = vld [vmem:[%s505 + $0x20] sm:$0x1]
        %v563 = vld [vmem:[%s505 + $0x24] sm:$0xf]
        %v564 = vld [vmem:[%s505 + $0x28] sm:$0xf]
        %v565 = vld [vmem:[%s505 + $0x2c] sm:$0x1]
        %v566 = vld [vmem:[%s505 + $0x30] sm:$0xf]
        %v567 = vld [vmem:[%s505 + $0x34] sm:$0xf]
        %v568 = vld [vmem:[%s505 + $0x38] sm:$0x1]
        %v569 = vld [vmem:[%s505 + $0x3c] sm:$0xf]
        %v570 = vld [vmem:[%s505 + $0x40] sm:$0xf]
        %v571 = vld [vmem:[%s505 + $0x44] sm:$0x1]
        %v572 = vld [vmem:[%s505 + $0x48] sm:$0xf]
        %v573 = vld [vmem:[%s505 + $0x4c] sm:$0xf]
        %v574 = vld [vmem:[%s505 + $0x50] sm:$0x1]
        %v575 = vld [vmem:[%s505 + $0x54] sm:$0xf]
        %v576 = vld [vmem:[%s505 + $0x58] sm:$0xf]
        %v577 = vld [vmem:[%s505 + $0x5c] sm:$0x1]
        %v578 = vld [vmem:[%s540] sm:$0x3]
        %vm579 = vsmask.f32 3328
        %vm580 = vsmask.f32 7440
        %vm581 = vmor %vm579, %vm580
        %v583 = vshrl.u32 %v554, 16
        %v585 = vrot.slane %v583, 4
        %v586 = vshll.u32 %v554, 16
        %v588 = vrot.slane %v586, 5
        %v589 = vor.u32 %v585, %v588
        %v590 = vrot.slane %v589, 4
        %v592 = vshll.u32 %v555, 16
        %v594 = vrot.slane %v592, 5
        %v595 = vsel %vm581, %v590, %v594
        %v596 = vshrl.u32 %v555, 16
        %v598 = vrot.slane %v596, 4
        %v599 = vor.u32 %v598, %v594
        %v600 = vrot.slane %v599, 4
        %v602 = vshll.u32 %v556, 16
        %v604 = vrot.slane %v602, 5
        %v605 = vsel %vm581, %v600, %v604
        %v607 = vshrl.u32 %v557, 16
        %v609 = vrot.slane %v607, 4
        %v610 = vshll.u32 %v557, 16
        %v612 = vrot.slane %v610, 5
        %v613 = vor.u32 %v609, %v612
        %v614 = vrot.slane %v613, 4
        %v616 = vshll.u32 %v558, 16
        %v618 = vrot.slane %v616, 5
        %v619 = vsel %vm581, %v614, %v618
        %v620 = vshrl.u32 %v558, 16
        %v622 = vrot.slane %v620, 4
        %v623 = vor.u32 %v622, %v618
        %v624 = vrot.slane %v623, 4
        %v626 = vshll.u32 %v559, 16
        %v628 = vrot.slane %v626, 5
        %v629 = vsel %vm581, %v624, %v628
        %v631 = vshrl.u32 %v560, 16
        %v633 = vrot.slane %v631, 4
        %v634 = vshll.u32 %v560, 16
        %v636 = vrot.slane %v634, 5
        %v637 = vor.u32 %v633, %v636
        %v638 = vrot.slane %v637, 4
        %v640 = vshll.u32 %v561, 16
        %v642 = vrot.slane %v640, 5
        %v643 = vsel %vm581, %v638, %v642
        %v644 = vshrl.u32 %v561, 16
        %v646 = vrot.slane %v644, 4
        %v647 = vor.u32 %v646, %v642
        %v648 = vrot.slane %v647, 4
        %v650 = vshll.u32 %v562, 16
        %v652 = vrot.slane %v650, 5
        %v653 = vsel %vm581, %v648, %v652
        %v655 = vshrl.u32 %v563, 16
        %v657 = vrot.slane %v655, 4
        %v658 = vshll.u32 %v563, 16
        %v660 = vrot.slane %v658, 5
        %v661 = vor.u32 %v657, %v660
        %v662 = vrot.slane %v661, 4
        %v664 = vshll.u32 %v564, 16
        %v666 = vrot.slane %v664, 5
        %v667 = vsel %vm581, %v662, %v666
        %v668 = vshrl.u32 %v564, 16
        %v670 = vrot.slane %v668, 4
        %v671 = vor.u32 %v670, %v666
        %v672 = vrot.slane %v671, 4
        %v674 = vshll.u32 %v565, 16
        %v676 = vrot.slane %v674, 5
        %v677 = vsel %vm581, %v672, %v676
        %v679 = vshrl.u32 %v566, 16
        %v681 = vrot.slane %v679, 4
        %v682 = vshll.u32 %v566, 16
        %v684 = vrot.slane %v682, 5
        %v685 = vor.u32 %v681, %v684
        %v686 = vrot.slane %v685, 4
        %v688 = vshll.u32 %v567, 16
        %v690 = vrot.slane %v688, 5
        %v691 = vsel %vm581, %v686, %v690
        %v692 = vshrl.u32 %v567, 16
        %v694 = vrot.slane %v692, 4
        %v695 = vor.u32 %v694, %v690
        %v696 = vrot.slane %v695, 4
        %v698 = vshll.u32 %v568, 16
        %v700 = vrot.slane %v698, 5
        %v701 = vsel %vm581, %v696, %v700
        %v703 = vshrl.u32 %v569, 16
        %v705 = vrot.slane %v703, 4
        %v706 = vshll.u32 %v569, 16
        %v708 = vrot.slane %v706, 5
        %v709 = vor.u32 %v705, %v708
        %v710 = vrot.slane %v709, 4
        %v712 = vshll.u32 %v570, 16
        %v714 = vrot.slane %v712, 5
        %v715 = vsel %vm581, %v710, %v714
        %v716 = vshrl.u32 %v570, 16
        %v718 = vrot.slane %v716, 4
        %v719 = vor.u32 %v718, %v714
        %v720 = vrot.slane %v719, 4
        %v722 = vshll.u32 %v571, 16
        %v724 = vrot.slane %v722, 5
        %v725 = vsel %vm581, %v720, %v724
        %v727 = vshrl.u32 %v572, 16
        %v729 = vrot.slane %v727, 4
        %v730 = vshll.u32 %v572, 16
        %v732 = vrot.slane %v730, 5
        %v733 = vor.u32 %v729, %v732
        %v734 = vrot.slane %v733, 4
        %v736 = vshll.u32 %v573, 16
        %v738 = vrot.slane %v736, 5
        %v739 = vsel %vm581, %v734, %v738
        %v740 = vshrl.u32 %v573, 16
        %v742 = vrot.slane %v740, 4
        %v743 = vor.u32 %v742, %v738
        %v744 = vrot.slane %v743, 4
        %v746 = vshll.u32 %v574, 16
        %v748 = vrot.slane %v746, 5
        %v749 = vsel %vm581, %v744, %v748
        %v751 = vshrl.u32 %v575, 16
        %v753 = vrot.slane %v751, 4
        %v754 = vshll.u32 %v575, 16
        %v756 = vrot.slane %v754, 5
        %v757 = vor.u32 %v753, %v756
        %v758 = vrot.slane %v757, 4
        %v760 = vshll.u32 %v576, 16
        %v762 = vrot.slane %v760, 5
        %v763 = vsel %vm581, %v758, %v762
        %v764 = vshrl.u32 %v576, 16
        %v766 = vrot.slane %v764, 4
        %v767 = vor.u32 %v766, %v762
        %v768 = vrot.slane %v767, 4
        %v770 = vshll.u32 %v577, 16
        %v772 = vrot.slane %v770, 5
        %v773 = vsel %vm581, %v768, %v772
        %s774 = scalar_lea.vmem %s540, 2
        %v775 = vld [vmem:[%s774] sm:$0x3]
        %v776 = vunpack.c.l.b16 %v595
        %v777 = vunpack.c.l.b16 %v605
        %v778 = vunpack.c.l.b16 %v619
        %v779 = vunpack.c.l.b16 %v629
        %v780 = vunpack.c.l.b16 %v643
        %v781 = vunpack.c.l.b16 %v653
        %v782 = vunpack.c.l.b16 %v667
        %v783 = vunpack.c.l.b16 %v677
        %v784 = vunpack.c.l.b16 %v691
        %v785 = vunpack.c.l.b16 %v701
        %v786 = vunpack.c.l.b16 %v715
        %v787 = vunpack.c.l.b16 %v725
        %v788 = vunpack.c.l.b16 %v739
        %v789 = vunpack.c.l.b16 %v749
        %v790 = vunpack.c.l.b16 %v763
        %v791 = vunpack.c.l.b16 %v773
        %v792 = vpack.c.b16 %v777, %v776
        %v793 = vpack.c.b16 %v779, %v778
        %v794 = vpack.c.b16 %v781, %v780
        %v795 = vpack.c.b16 %v783, %v782
        %v796 = vpack.c.b16 %v785, %v784
        %v797 = vpack.c.b16 %v787, %v786
        %v798 = vpack.c.b16 %v789, %v788
        %v799 = vpack.c.b16 %v791, %v790
        %vm800 = vcmask 31744
        %v802 = vsel %vm800, %v792, 0
        %v805 = vsel %vm800, %v793, 0
        %v808 = vsel %vm800, %v794, 0
        %v811 = vsel %vm800, %v795, 0
        %v814 = vsel %vm800, %v796, 0
        %v817 = vsel %vm800, %v797, 0
        %v820 = vsel %vm800, %v798, 0
        %v823 = vsel %vm800, %v799, 0
        %vm825 = vcmask 1041408
        %v827 = vsel %vm825, %v775, 0
        %829 = vmatprep.subr.bf16.mxu0 0
        %830 = vmatpush1.bf16.msra.mxu0 0
        %831 = vmatprep.subr.bf16.mxu0 0
        %832 = vmatpush1.bf16.msra.mxu0 0
        %833 = vmatprep.subr.bf16.mxu0 0
        %834 = vmatpush1.bf16.msra.mxu0 0
        %835 = vmatprep.subr.bf16.mxu0 0
        %836 = vmatpush1.bf16.msra.mxu0 0
        %837 = vmatprep.subr.bf16.mxu0 0
        %838 = vmatpush1.bf16.msra.mxu0 0
        %839 = vmatprep.subr.bf16.mxu0 0
        %840 = vmatpush1.bf16.msra.mxu0 0
        %841 = vmatprep.subr.bf16.mxu0 0
        %842 = vmatpush1.bf16.msra.mxu0 0
        %843 = vmatprep.subr.bf16.mxu0 0
        %844 = vmatpush1.bf16.msra.mxu0 %v827
        %845 = vmatprep.subr.bf16.mxu0 0
        %846 = vmatpush2.bf16.msra.mxu0 0
        %847 = vmatprep.subr.bf16.mxu0 0
        %848 = vmatpush2.bf16.msra.mxu0 0
        %849 = vmatprep.subr.bf16.mxu0 0
        %850 = vmatpush2.bf16.msra.mxu0 0
        %851 = vmatprep.subr.bf16.mxu0 0
        %852 = vmatpush2.bf16.msra.mxu0 0
        %853 = vmatprep.subr.bf16.mxu0 0
        %854 = vmatpush2.bf16.msra.mxu0 0
        %855 = vmatprep.subr.bf16.mxu0 0
        %856 = vmatpush2.bf16.msra.mxu0 0
        %857 = vmatprep.subr.bf16.mxu0 0
        %858 = vmatpush2.bf16.msra.mxu0 0
        %859 = vmatprep.subr.bf16.mxu0 0
        %860 = vmatpush2.bf16.msra.mxu0 0
        %861 = vmatprep.mubr.bf16.mxu0 0
        %862 = vmatmul.mubr.bf16.gmra.mxu0 %v802
        %v863 = vpop.f32.mrf.mxu0
        %v864 = vadd.f32 0.0, %v863
        %v865 = vpop.f32.mrf.mxu0
        %v866 = vpop.f32.mrf.mxu0
        %v867 = vadd.f32 0.0, %v866
        %v868 = vpop.f32.mrf.mxu0
        %869 = vmatprep.mubr.bf16.mxu0 0
        %870 = vmatmul.mubr.bf16.gmra.mxu0 %v805
        %v871 = vpop.f32.mrf.mxu0
        %v872 = vadd.f32 0.0, %v871
        %v873 = vpop.f32.mrf.mxu0
        %v874 = vpop.f32.mrf.mxu0
        %v875 = vadd.f32 0.0, %v874
        %v876 = vpop.f32.mrf.mxu0
        %877 = vmatprep.mubr.bf16.mxu0 0
        %878 = vmatmul.mubr.bf16.gmra.mxu0 %v808
        %v879 = vpop.f32.mrf.mxu0
        %v880 = vadd.f32 0.0, %v879
        %v881 = vpop.f32.mrf.mxu0
        %v882 = vpop.f32.mrf.mxu0
        %v883 = vadd.f32 0.0, %v882
        %v884 = vpop.f32.mrf.mxu0
        %885 = vmatprep.mubr.bf16.mxu0 0
        %886 = vmatmul.mubr.bf16.gmra.mxu0 %v811
        %v887 = vpop.f32.mrf.mxu0
        %v888 = vadd.f32 0.0, %v887
        %v889 = vpop.f32.mrf.mxu0
        %v890 = vpop.f32.mrf.mxu0
        %v891 = vadd.f32 0.0, %v890
        %v892 = vpop.f32.mrf.mxu0
        %893 = vmatprep.mubr.bf16.mxu0 0
        %894 = vmatmul.mubr.bf16.gmra.mxu0 %v814
        %v895 = vpop.f32.mrf.mxu0
        %v896 = vadd.f32 0.0, %v895
        %v897 = vpop.f32.mrf.mxu0
        %v898 = vpop.f32.mrf.mxu0
        %v899 = vadd.f32 0.0, %v898
        %v900 = vpop.f32.mrf.mxu0
        %901 = vmatprep.mubr.bf16.mxu0 0
        %902 = vmatmul.mubr.bf16.gmra.mxu0 %v817
        %v903 = vpop.f32.mrf.mxu0
        %v904 = vadd.f32 0.0, %v903
        %v905 = vpop.f32.mrf.mxu0
        %v906 = vpop.f32.mrf.mxu0
        %v907 = vadd.f32 0.0, %v906
        %v908 = vpop.f32.mrf.mxu0
        %909 = vmatprep.mubr.bf16.mxu0 0
        %910 = vmatmul.mubr.bf16.gmra.mxu0 %v820
        %v911 = vpop.f32.mrf.mxu0
        %v912 = vadd.f32 0.0, %v911
        %v913 = vpop.f32.mrf.mxu0
        %v914 = vpop.f32.mrf.mxu0
        %v915 = vadd.f32 0.0, %v914
        %v916 = vpop.f32.mrf.mxu0
        %917 = vmatprep.mubr.bf16.mxu0 0
        %918 = vmatmul.mubr.bf16.gmra.mxu0 %v823
        %v919 = vpop.f32.mrf.mxu0
        %v920 = vadd.f32 0.0, %v919
        %v921 = vpop.f32.mrf.mxu0
        %v922 = vpop.f32.mrf.mxu0
        %v923 = vadd.f32 0.0, %v922
        %v924 = vpop.f32.mrf.mxu0
        %925 = vdwg.mxu0
        %v942 = vunpack.c.l.b16 %v554
        %v943 = vunpack.c.l.b16 %v555
        %v944 = vunpack.c.l.b16 %v557
        %v945 = vunpack.c.l.b16 %v558
        %v946 = vunpack.c.l.b16 %v560
        %v947 = vunpack.c.l.b16 %v561
        %v948 = vunpack.c.l.b16 %v563
        %v949 = vunpack.c.l.b16 %v564
        %v950 = vunpack.c.l.b16 %v566
        %v951 = vunpack.c.l.b16 %v567
        %v952 = vunpack.c.l.b16 %v569
        %v953 = vunpack.c.l.b16 %v570
        %v954 = vunpack.c.l.b16 %v572
        %v955 = vunpack.c.l.b16 %v573
        %v956 = vunpack.c.l.b16 %v575
        %v957 = vunpack.c.l.b16 %v576
        %v958 = vpack.c.b16 %v943, %v942
        %v959 = vpack.c.b16 %v945, %v944
        %v960 = vpack.c.b16 %v947, %v946
        %v961 = vpack.c.b16 %v949, %v948
        %v962 = vpack.c.b16 %v951, %v950
        %v963 = vpack.c.b16 %v953, %v952
        %v964 = vpack.c.b16 %v955, %v954
        %v965 = vpack.c.b16 %v957, %v956
        %v967 = vsel %vm800, %v958, 0
        %v970 = vsel %vm800, %v959, 0
        %v973 = vsel %vm800, %v960, 0
        %v976 = vsel %vm800, %v961, 0
        %v979 = vsel %vm800, %v962, 0
        %v982 = vsel %vm800, %v963, 0
        %v985 = vsel %vm800, %v964, 0
        %v988 = vsel %vm800, %v965, 0
        %v991 = vsel %vm825, %v578, 0
        %993 = vmatprep.subr.bf16.mxu0 0
        %994 = vmatpush1.bf16.msra.mxu0 0
        %995 = vmatprep.subr.bf16.mxu0 0
        %996 = vmatpush1.bf16.msra.mxu0 0
        %997 = vmatprep.subr.bf16.mxu0 0
        %998 = vmatpush1.bf16.msra.mxu0 0
        %999 = vmatprep.subr.bf16.mxu0 0
        %1000 = vmatpush1.bf16.msra.mxu0 0
        %1001 = vmatprep.subr.bf16.mxu0 0
        %1002 = vmatpush1.bf16.msra.mxu0 0
        %1003 = vmatprep.subr.bf16.mxu0 0
        %1004 = vmatpush1.bf16.msra.mxu0 0
        %1005 = vmatprep.subr.bf16.mxu0 0
        %1006 = vmatpush1.bf16.msra.mxu0 0
        %1007 = vmatprep.subr.bf16.mxu0 0
        %1008 = vmatpush1.bf16.msra.mxu0 %v991
        %1009 = vmatprep.subr.bf16.mxu0 0
        %1010 = vmatpush2.bf16.msra.mxu0 0
        %1011 = vmatprep.subr.bf16.mxu0 0
        %1012 = vmatpush2.bf16.msra.mxu0 0
        %1013 = vmatprep.subr.bf16.mxu0 0
        %1014 = vmatpush2.bf16.msra.mxu0 0
        %1015 = vmatprep.subr.bf16.mxu0 0
        %1016 = vmatpush2.bf16.msra.mxu0 0
        %1017 = vmatprep.subr.bf16.mxu0 0
        %1018 = vmatpush2.bf16.msra.mxu0 0
        %1019 = vmatprep.subr.bf16.mxu0 0
        %1020 = vmatpush2.bf16.msra.mxu0 0
        %1021 = vmatprep.subr.bf16.mxu0 0
        %1022 = vmatpush2.bf16.msra.mxu0 0
        %1023 = vmatprep.subr.bf16.mxu0 0
        %1024 = vmatpush2.bf16.msra.mxu0 0
        %1025 = vmatprep.mubr.bf16.mxu0 0
        %1026 = vmatmul.mubr.bf16.gmra.mxu0 %v967
        %v1027 = vpop.f32.mrf.mxu0
        %v1028 = vadd.f32 %v864, %v1027
        %v1029 = vpop.f32.mrf.mxu0
        %v1030 = vpop.f32.mrf.mxu0
        %v1031 = vadd.f32 %v867, %v1030
        %v1032 = vpop.f32.mrf.mxu0
        %1033 = vmatprep.mubr.bf16.mxu0 0
        %1034 = vmatmul.mubr.bf16.gmra.mxu0 %v970
        %v1035 = vpop.f32.mrf.mxu0
        %v1036 = vadd.f32 %v872, %v1035
        %v1037 = vpop.f32.mrf.mxu0
        %v1038 = vpop.f32.mrf.mxu0
        %v1039 = vadd.f32 %v875, %v1038
        %v1040 = vpop.f32.mrf.mxu0
        %1041 = vmatprep.mubr.bf16.mxu0 0
        %1042 = vmatmul.mubr.bf16.gmra.mxu0 %v973
        %v1043 = vpop.f32.mrf.mxu0
        %v1044 = vadd.f32 %v880, %v1043
        %v1045 = vpop.f32.mrf.mxu0
        %v1046 = vpop.f32.mrf.mxu0
        %v1047 = vadd.f32 %v883, %v1046
        %v1048 = vpop.f32.mrf.mxu0
        %1049 = vmatprep.mubr.bf16.mxu0 0
        %1050 = vmatmul.mubr.bf16.gmra.mxu0 %v976
        %v1051 = vpop.f32.mrf.mxu0
        %v1052 = vadd.f32 %v888, %v1051
        %v1053 = vpop.f32.mrf.mxu0
        %v1054 = vpop.f32.mrf.mxu0
        %v1055 = vadd.f32 %v891, %v1054
        %v1056 = vpop.f32.mrf.mxu0
        %1057 = vmatprep.mubr.bf16.mxu0 0
        %1058 = vmatmul.mubr.bf16.gmra.mxu0 %v979
        %v1059 = vpop.f32.mrf.mxu0
        %v1060 = vadd.f32 %v896, %v1059
        %v1061 = vpop.f32.mrf.mxu0
        %v1062 = vpop.f32.mrf.mxu0
        %v1063 = vadd.f32 %v899, %v1062
        %v1064 = vpop.f32.mrf.mxu0
        %1065 = vmatprep.mubr.bf16.mxu0 0
        %1066 = vmatmul.mubr.bf16.gmra.mxu0 %v982
        %v1067 = vpop.f32.mrf.mxu0
        %v1068 = vadd.f32 %v904, %v1067
        %v1069 = vpop.f32.mrf.mxu0
        %v1070 = vpop.f32.mrf.mxu0
        %v1071 = vadd.f32 %v907, %v1070
        %v1072 = vpop.f32.mrf.mxu0
        %1073 = vmatprep.mubr.bf16.mxu0 0
        %1074 = vmatmul.mubr.bf16.gmra.mxu0 %v985
        %v1075 = vpop.f32.mrf.mxu0
        %v1076 = vadd.f32 %v912, %v1075
        %v1077 = vpop.f32.mrf.mxu0
        %v1078 = vpop.f32.mrf.mxu0
        %v1079 = vadd.f32 %v915, %v1078
        %v1080 = vpop.f32.mrf.mxu0
        %1081 = vmatprep.mubr.bf16.mxu0 0
        %1082 = vmatmul.mubr.bf16.gmra.mxu0 %v988
        %v1083 = vpop.f32.mrf.mxu0
        %v1084 = vadd.f32 %v920, %v1083
        %v1085 = vpop.f32.mrf.mxu0
        %v1086 = vpop.f32.mrf.mxu0
        %v1087 = vadd.f32 %v923, %v1086
        %v1088 = vpop.f32.mrf.mxu0
        %1089 = vdwg.mxu0
        %vm1098 = vcmask 1042432
        %vm1099 = vcmask 1046532
        %vm1100 = vmor %vm1098, %vm1099
        %v1101 = vrot.slane %v554, 5
        %v1102 = vrot.slane %v1101, 4
        %v1103 = vrot.slane %v555, 5
        %v1104 = vsel %vm1100, %v1102, %v1103
        %v1105 = vrot.slane %v1103, 4
        %v1106 = vrot.slane %v556, 5
        %v1107 = vsel %vm1100, %v1105, %v1106
        %v1108 = vrot.slane %v557, 5
        %v1109 = vrot.slane %v1108, 4
        %v1110 = vrot.slane %v558, 5
        %v1111 = vsel %vm1100, %v1109, %v1110
        %v1112 = vrot.slane %v1110, 4
        %v1113 = vrot.slane %v559, 5
        %v1114 = vsel %vm1100, %v1112, %v1113
        %v1115 = vrot.slane %v560, 5
        %v1116 = vrot.slane %v1115, 4
        %v1117 = vrot.slane %v561, 5
        %v1118 = vsel %vm1100, %v1116, %v1117
        %v1119 = vrot.slane %v1117, 4
        %v1120 = vrot.slane %v562, 5
        %v1121 = vsel %vm1100, %v1119, %v1120
        %v1122 = vrot.slane %v563, 5
        %v1123 = vrot.slane %v1122, 4
        %v1124 = vrot.slane %v564, 5
        %v1125 = vsel %vm1100, %v1123, %v1124
        %v1126 = vrot.slane %v1124, 4
        %v1127 = vrot.slane %v565, 5
        %v1128 = vsel %vm1100, %v1126, %v1127
        %v1129 = vrot.slane %v566, 5
        %v1130 = vrot.slane %v1129, 4
        %v1131 = vrot.slane %v567, 5
        %v1132 = vsel %vm1100, %v1130, %v1131
        %v1133 = vrot.slane %v1131, 4
        %v1134 = vrot.slane %v568, 5
        %v1135 = vsel %vm1100, %v1133, %v1134
        %v1136 = vrot.slane %v569, 5
        %v1137 = vrot.slane %v1136, 4
        %v1138 = vrot.slane %v570, 5
        %v1139 = vsel %vm1100, %v1137, %v1138
        %v1140 = vrot.slane %v1138, 4
        %v1141 = vrot.slane %v571, 5
        %v1142 = vsel %vm1100, %v1140, %v1141
        %v1143 = vrot.slane %v572, 5
        %v1144 = vrot.slane %v1143, 4
        %v1145 = vrot.slane %v573, 5
        %v1146 = vsel %vm1100, %v1144, %v1145
        %v1147 = vrot.slane %v1145, 4
        %v1148 = vrot.slane %v574, 5
        %v1149 = vsel %vm1100, %v1147, %v1148
        %v1150 = vrot.slane %v575, 5
        %v1151 = vrot.slane %v1150, 4
        %v1152 = vrot.slane %v576, 5
        %v1153 = vsel %vm1100, %v1151, %v1152
        %v1154 = vrot.slane %v1152, 4
        %v1155 = vrot.slane %v577, 5
        %v1156 = vsel %vm1100, %v1154, %v1155
        %s1157 = scalar_lea.vmem %s540, 4
        %v1158 = vld [vmem:[%s1157] sm:$0x3]
        %v1159 = vunpack.c.l.b16 %v1104
        %v1160 = vunpack.c.l.b16 %v1107
        %v1161 = vunpack.c.l.b16 %v1111
        %v1162 = vunpack.c.l.b16 %v1114
        %v1163 = vunpack.c.l.b16 %v1118
        %v1164 = vunpack.c.l.b16 %v1121
        %v1165 = vunpack.c.l.b16 %v1125
        %v1166 = vunpack.c.l.b16 %v1128
        %v1167 = vunpack.c.l.b16 %v1132
        %v1168 = vunpack.c.l.b16 %v1135
        %v1169 = vunpack.c.l.b16 %v1139
        %v1170 = vunpack.c.l.b16 %v1142
        %v1171 = vunpack.c.l.b16 %v1146
        %v1172 = vunpack.c.l.b16 %v1149
        %v1173 = vunpack.c.l.b16 %v1153
        %v1174 = vunpack.c.l.b16 %v1156
        %v1175 = vpack.c.b16 %v1160, %v1159
        %v1176 = vpack.c.b16 %v1162, %v1161
        %v1177 = vpack.c.b16 %v1164, %v1163
        %v1178 = vpack.c.b16 %v1166, %v1165
        %v1179 = vpack.c.b16 %v1168, %v1167
        %v1180 = vpack.c.b16 %v1170, %v1169
        %v1181 = vpack.c.b16 %v1172, %v1171
        %v1182 = vpack.c.b16 %v1174, %v1173
        %v1184 = vsel %vm800, %v1175, 0
        %v1187 = vsel %vm800, %v1176, 0
        %v1190 = vsel %vm800, %v1177, 0
        %v1193 = vsel %vm800, %v1178, 0
        %v1196 = vsel %vm800, %v1179, 0
        %v1199 = vsel %vm800, %v1180, 0
        %v1202 = vsel %vm800, %v1181, 0
        %v1205 = vsel %vm800, %v1182, 0
        %v1208 = vsel %vm825, %v1158, 0
        %1210 = vmatprep.subr.bf16.mxu0 0
        %1211 = vmatpush1.bf16.msra.mxu0 0
        %1212 = vmatprep.subr.bf16.mxu0 0
        %1213 = vmatpush1.bf16.msra.mxu0 0
        %1214 = vmatprep.subr.bf16.mxu0 0
        %1215 = vmatpush1.bf16.msra.mxu0 0
        %1216 = vmatprep.subr.bf16.mxu0 0
        %1217 = vmatpush1.bf16.msra.mxu0 0
        %1218 = vmatprep.subr.bf16.mxu0 0
        %1219 = vmatpush1.bf16.msra.mxu0 0
        %1220 = vmatprep.subr.bf16.mxu0 0
        %1221 = vmatpush1.bf16.msra.mxu0 0
        %1222 = vmatprep.subr.bf16.mxu0 0
        %1223 = vmatpush1.bf16.msra.mxu0 0
        %1224 = vmatprep.subr.bf16.mxu0 0
        %1225 = vmatpush1.bf16.msra.mxu0 %v1208
        %1226 = vmatprep.subr.bf16.mxu0 0
        %1227 = vmatpush2.bf16.msra.mxu0 0
        %1228 = vmatprep.subr.bf16.mxu0 0
        %1229 = vmatpush2.bf16.msra.mxu0 0
        %1230 = vmatprep.subr.bf16.mxu0 0
        %1231 = vmatpush2.bf16.msra.mxu0 0
        %1232 = vmatprep.subr.bf16.mxu0 0
        %1233 = vmatpush2.bf16.msra.mxu0 0
        %1234 = vmatprep.subr.bf16.mxu0 0
        %1235 = vmatpush2.bf16.msra.mxu0 0
        %1236 = vmatprep.subr.bf16.mxu0 0
        %1237 = vmatpush2.bf16.msra.mxu0 0
        %1238 = vmatprep.subr.bf16.mxu0 0
        %1239 = vmatpush2.bf16.msra.mxu0 0
        %1240 = vmatprep.subr.bf16.mxu0 0
        %1241 = vmatpush2.bf16.msra.mxu0 0
        %1242 = vmatprep.mubr.bf16.mxu0 0
        %1243 = vmatmul.mubr.bf16.gmra.mxu0 %v1184
        %v1244 = vpop.f32.mrf.mxu0
        %v1245 = vadd.f32 0.0, %v1244
        %v1246 = vpop.f32.mrf.mxu0
        %v1247 = vpop.f32.mrf.mxu0
        %v1248 = vadd.f32 0.0, %v1247
        %v1249 = vpop.f32.mrf.mxu0
        %1250 = vmatprep.mubr.bf16.mxu0 0
        %1251 = vmatmul.mubr.bf16.gmra.mxu0 %v1187
        %v1252 = vpop.f32.mrf.mxu0
        %v1253 = vadd.f32 0.0, %v1252
        %v1254 = vpop.f32.mrf.mxu0
        %v1255 = vpop.f32.mrf.mxu0
        %v1256 = vadd.f32 0.0, %v1255
        %v1257 = vpop.f32.mrf.mxu0
        %1258 = vmatprep.mubr.bf16.mxu0 0
        %1259 = vmatmul.mubr.bf16.gmra.mxu0 %v1190
        %v1260 = vpop.f32.mrf.mxu0
        %v1261 = vadd.f32 0.0, %v1260
        %v1262 = vpop.f32.mrf.mxu0
        %v1263 = vpop.f32.mrf.mxu0
        %v1264 = vadd.f32 0.0, %v1263
        %v1265 = vpop.f32.mrf.mxu0
        %1266 = vmatprep.mubr.bf16.mxu0 0
        %1267 = vmatmul.mubr.bf16.gmra.mxu0 %v1193
        %v1268 = vpop.f32.mrf.mxu0
        %v1269 = vadd.f32 0.0, %v1268
        %v1270 = vpop.f32.mrf.mxu0
        %v1271 = vpop.f32.mrf.mxu0
        %v1272 = vadd.f32 0.0, %v1271
        %v1273 = vpop.f32.mrf.mxu0
        %1274 = vmatprep.mubr.bf16.mxu0 0
        %1275 = vmatmul.mubr.bf16.gmra.mxu0 %v1196
        %v1276 = vpop.f32.mrf.mxu0
        %v1277 = vadd.f32 0.0, %v1276
        %v1278 = vpop.f32.mrf.mxu0
        %v1279 = vpop.f32.mrf.mxu0
        %v1280 = vadd.f32 0.0, %v1279
        %v1281 = vpop.f32.mrf.mxu0
        %1282 = vmatprep.mubr.bf16.mxu0 0
        %1283 = vmatmul.mubr.bf16.gmra.mxu0 %v1199
        %v1284 = vpop.f32.mrf.mxu0
        %v1285 = vadd.f32 0.0, %v1284
        %v1286 = vpop.f32.mrf.mxu0
        %v1287 = vpop.f32.mrf.mxu0
        %v1288 = vadd.f32 0.0, %v1287
        %v1289 = vpop.f32.mrf.mxu0
        %1290 = vmatprep.mubr.bf16.mxu0 0
        %1291 = vmatmul.mubr.bf16.gmra.mxu0 %v1202
        %v1292 = vpop.f32.mrf.mxu0
        %v1293 = vadd.f32 0.0, %v1292
        %v1294 = vpop.f32.mrf.mxu0
        %v1295 = vpop.f32.mrf.mxu0
        %v1296 = vadd.f32 0.0, %v1295
        %v1297 = vpop.f32.mrf.mxu0
        %1298 = vmatprep.mubr.bf16.mxu0 0
        %1299 = vmatmul.mubr.bf16.gmra.mxu0 %v1205
        %v1300 = vpop.f32.mrf.mxu0
        %v1301 = vadd.f32 0.0, %v1300
        %v1302 = vpop.f32.mrf.mxu0
        %v1303 = vpop.f32.mrf.mxu0
        %v1304 = vadd.f32 0.0, %v1303
        %v1305 = vpop.f32.mrf.mxu0
        %1306 = vdwg.mxu0
        %v1307 = vadd.f32 %v1028, %v1245
        %v1308 = vadd.f32 %v1031, %v1248
        %v1309 = vadd.f32 %v1036, %v1253
        %v1310 = vadd.f32 %v1039, %v1256
        %v1311 = vadd.f32 %v1044, %v1261
        %v1312 = vadd.f32 %v1047, %v1264
        %v1313 = vadd.f32 %v1052, %v1269
        %v1314 = vadd.f32 %v1055, %v1272
        %v1315 = vadd.f32 %v1060, %v1277
        %v1316 = vadd.f32 %v1063, %v1280
        %v1317 = vadd.f32 %v1068, %v1285
        %v1318 = vadd.f32 %v1071, %v1288
        %v1319 = vadd.f32 %v1076, %v1293
        %v1320 = vadd.f32 %v1079, %v1296
        %v1321 = vadd.f32 %v1084, %v1301
        %v1322 = vadd.f32 %v1087, %v1304
        %s1323 = scalar_lea.vmem %s505, 96 [#allocation2]
        %v1324 = vld [vmem:[%s1323] sm:$0xf]
        %v1325 = vld [vmem:[%s1323 + $0x4] sm:$0xf]
        %v1326 = vld [vmem:[%s1323 + $0x8] sm:$0x1]
        %v1327 = vld [vmem:[%s1323 + $0xc] sm:$0xf]
        %v1328 = vld [vmem:[%s1323 + $0x10] sm:$0xf]
        %v1329 = vld [vmem:[%s1323 + $0x14] sm:$0x1]
        %v1330 = vld [vmem:[%s1323 + $0x18] sm:$0xf]
        %v1331 = vld [vmem:[%s1323 + $0x1c] sm:$0xf]
        %v1332 = vld [vmem:[%s1323 + $0x20] sm:$0x1]
        %v1333 = vld [vmem:[%s1323 + $0x24] sm:$0xf]
        %v1334 = vld [vmem:[%s1323 + $0x28] sm:$0xf]
        %v1335 = vld [vmem:[%s1323 + $0x2c] sm:$0x1]
        %v1336 = vld [vmem:[%s1323 + $0x30] sm:$0xf]
        %v1337 = vld [vmem:[%s1323 + $0x34] sm:$0xf]
        %v1338 = vld [vmem:[%s1323 + $0x38] sm:$0x1]
        %v1339 = vld [vmem:[%s1323 + $0x3c] sm:$0xf]
        %v1340 = vld [vmem:[%s1323 + $0x40] sm:$0xf]
        %v1341 = vld [vmem:[%s1323 + $0x44] sm:$0x1]
        %v1342 = vld [vmem:[%s1323 + $0x48] sm:$0xf]
        %v1343 = vld [vmem:[%s1323 + $0x4c] sm:$0xf]
        %v1344 = vld [vmem:[%s1323 + $0x50] sm:$0x1]
        %v1345 = vld [vmem:[%s1323 + $0x54] sm:$0xf]
        %v1346 = vld [vmem:[%s1323 + $0x58] sm:$0xf]
        %v1347 = vld [vmem:[%s1323 + $0x5c] sm:$0x1]
        %s1348 = scalar_lea.vmem %s540, 6
        %v1349 = vld [vmem:[%s1348] sm:$0x3]
        %v1366 = vunpack.c.l.b16 %v1324
        %v1367 = vunpack.c.l.b16 %v1325
        %v1368 = vunpack.c.l.b16 %v1327
        %v1369 = vunpack.c.l.b16 %v1328
        %v1370 = vunpack.c.l.b16 %v1330
        %v1371 = vunpack.c.l.b16 %v1331
        %v1372 = vunpack.c.l.b16 %v1333
        %v1373 = vunpack.c.l.b16 %v1334
        %v1374 = vunpack.c.l.b16 %v1336
        %v1375 = vunpack.c.l.b16 %v1337
        %v1376 = vunpack.c.l.b16 %v1339
        %v1377 = vunpack.c.l.b16 %v1340
        %v1378 = vunpack.c.l.b16 %v1342
        %v1379 = vunpack.c.l.b16 %v1343
        %v1380 = vunpack.c.l.b16 %v1345
        %v1381 = vunpack.c.l.b16 %v1346
        %v1382 = vpack.c.b16 %v1367, %v1366
        %v1383 = vpack.c.b16 %v1369, %v1368
        %v1384 = vpack.c.b16 %v1371, %v1370
        %v1385 = vpack.c.b16 %v1373, %v1372
        %v1386 = vpack.c.b16 %v1375, %v1374
        %v1387 = vpack.c.b16 %v1377, %v1376
        %v1388 = vpack.c.b16 %v1379, %v1378
        %v1389 = vpack.c.b16 %v1381, %v1380
        %v1391 = vsel %vm800, %v1382, 0
        %v1394 = vsel %vm800, %v1383, 0
        %v1397 = vsel %vm800, %v1384, 0
        %v1400 = vsel %vm800, %v1385, 0
        %v1403 = vsel %vm800, %v1386, 0
        %v1406 = vsel %vm800, %v1387, 0
        %v1409 = vsel %vm800, %v1388, 0
        %v1412 = vsel %vm800, %v1389, 0
        %v1415 = vsel %vm825, %v1349, 0
        %1417 = vmatprep.subr.bf16.mxu0 0
        %1418 = vmatpush1.bf16.msra.mxu0 0
        %1419 = vmatprep.subr.bf16.mxu0 0
        %1420 = vmatpush1.bf16.msra.mxu0 0
        %1421 = vmatprep.subr.bf16.mxu0 0
        %1422 = vmatpush1.bf16.msra.mxu0 0
        %1423 = vmatprep.subr.bf16.mxu0 0
        %1424 = vmatpush1.bf16.msra.mxu0 0
        %1425 = vmatprep.subr.bf16.mxu0 0
        %1426 = vmatpush1.bf16.msra.mxu0 0
        %1427 = vmatprep.subr.bf16.mxu0 0
        %1428 = vmatpush1.bf16.msra.mxu0 0
        %1429 = vmatprep.subr.bf16.mxu0 0
        %1430 = vmatpush1.bf16.msra.mxu0 0
        %1431 = vmatprep.subr.bf16.mxu0 0
        %1432 = vmatpush1.bf16.msra.mxu0 %v1415
        %1433 = vmatprep.subr.bf16.mxu0 0
        %1434 = vmatpush2.bf16.msra.mxu0 0
        %1435 = vmatprep.subr.bf16.mxu0 0
        %1436 = vmatpush2.bf16.msra.mxu0 0
        %1437 = vmatprep.subr.bf16.mxu0 0
        %1438 = vmatpush2.bf16.msra.mxu0 0
        %1439 = vmatprep.subr.bf16.mxu0 0
        %1440 = vmatpush2.bf16.msra.mxu0 0
        %1441 = vmatprep.subr.bf16.mxu0 0
        %1442 = vmatpush2.bf16.msra.mxu0 0
        %1443 = vmatprep.subr.bf16.mxu0 0
        %1444 = vmatpush2.bf16.msra.mxu0 0
        %1445 = vmatprep.subr.bf16.mxu0 0
        %1446 = vmatpush2.bf16.msra.mxu0 0
        %1447 = vmatprep.subr.bf16.mxu0 0
        %1448 = vmatpush2.bf16.msra.mxu0 0
        %1449 = vmatprep.mubr.bf16.mxu0 0
        %1450 = vmatmul.mubr.bf16.gmra.mxu0 %v1391
        %v1451 = vpop.f32.mrf.mxu0
        %v1452 = vadd.f32 0.0, %v1451
        %v1453 = vpop.f32.mrf.mxu0
        %v1454 = vpop.f32.mrf.mxu0
        %v1455 = vadd.f32 0.0, %v1454
        %v1456 = vpop.f32.mrf.mxu0
        %1457 = vmatprep.mubr.bf16.mxu0 0
        %1458 = vmatmul.mubr.bf16.gmra.mxu0 %v1394
        %v1459 = vpop.f32.mrf.mxu0
        %v1460 = vadd.f32 0.0, %v1459
        %v1461 = vpop.f32.mrf.mxu0
        %v1462 = vpop.f32.mrf.mxu0
        %v1463 = vadd.f32 0.0, %v1462
        %v1464 = vpop.f32.mrf.mxu0
        %1465 = vmatprep.mubr.bf16.mxu0 0
        %1466 = vmatmul.mubr.bf16.gmra.mxu0 %v1397
        %v1467 = vpop.f32.mrf.mxu0
        %v1468 = vadd.f32 0.0, %v1467
        %v1469 = vpop.f32.mrf.mxu0
        %v1470 = vpop.f32.mrf.mxu0
        %v1471 = vadd.f32 0.0, %v1470
        %v1472 = vpop.f32.mrf.mxu0
        %1473 = vmatprep.mubr.bf16.mxu0 0
        %1474 = vmatmul.mubr.bf16.gmra.mxu0 %v1400
        %v1475 = vpop.f32.mrf.mxu0
        %v1476 = vadd.f32 0.0, %v1475
        %v1477 = vpop.f32.mrf.mxu0
        %v1478 = vpop.f32.mrf.mxu0
        %v1479 = vadd.f32 0.0, %v1478
        %v1480 = vpop.f32.mrf.mxu0
        %1481 = vmatprep.mubr.bf16.mxu0 0
        %1482 = vmatmul.mubr.bf16.gmra.mxu0 %v1403
        %v1483 = vpop.f32.mrf.mxu0
        %v1484 = vadd.f32 0.0, %v1483
        %v1485 = vpop.f32.mrf.mxu0
        %v1486 = vpop.f32.mrf.mxu0
        %v1487 = vadd.f32 0.0, %v1486
        %v1488 = vpop.f32.mrf.mxu0
        %1489 = vmatprep.mubr.bf16.mxu0 0
        %1490 = vmatmul.mubr.bf16.gmra.mxu0 %v1406
        %v1491 = vpop.f32.mrf.mxu0
        %v1492 = vadd.f32 0.0, %v1491
        %v1493 = vpop.f32.mrf.mxu0
        %v1494 = vpop.f32.mrf.mxu0
        %v1495 = vadd.f32 0.0, %v1494
        %v1496 = vpop.f32.mrf.mxu0
        %1497 = vmatprep.mubr.bf16.mxu0 0
        %1498 = vmatmul.mubr.bf16.gmra.mxu0 %v1409
        %v1499 = vpop.f32.mrf.mxu0
        %v1500 = vadd.f32 0.0, %v1499
        %v1501 = vpop.f32.mrf.mxu0
        %v1502 = vpop.f32.mrf.mxu0
        %v1503 = vadd.f32 0.0, %v1502
        %v1504 = vpop.f32.mrf.mxu0
        %1505 = vmatprep.mubr.bf16.mxu0 0
        %1506 = vmatmul.mubr.bf16.gmra.mxu0 %v1412
        %v1507 = vpop.f32.mrf.mxu0
        %v1508 = vadd.f32 0.0, %v1507
        %v1509 = vpop.f32.mrf.mxu0
        %v1510 = vpop.f32.mrf.mxu0
        %v1511 = vadd.f32 0.0, %v1510
        %v1512 = vpop.f32.mrf.mxu0
        %1513 = vdwg.mxu0
        %v1514 = vadd.f32 %v1307, %v1452
        %v1515 = vadd.f32 %v1308, %v1455
        %v1516 = vadd.f32 %v1309, %v1460
        %v1517 = vadd.f32 %v1310, %v1463
        %v1518 = vadd.f32 %v1311, %v1468
        %v1519 = vadd.f32 %v1312, %v1471
        %v1520 = vadd.f32 %v1313, %v1476
        %v1521 = vadd.f32 %v1314, %v1479
        %v1522 = vadd.f32 %v1315, %v1484
        %v1523 = vadd.f32 %v1316, %v1487
        %v1524 = vadd.f32 %v1317, %v1492
        %v1525 = vadd.f32 %v1318, %v1495
        %v1526 = vadd.f32 %v1319, %v1500
        %v1527 = vadd.f32 %v1320, %v1503
        %v1528 = vadd.f32 %v1321, %v1508
        %v1529 = vadd.f32 %v1322, %v1511
        %v1531 = vshrl.u32 %v1324, 16
        %v1533 = vrot.slane %v1531, 4
        %v1534 = vshll.u32 %v1324, 16
        %v1536 = vrot.slane %v1534, 5
        %v1537 = vor.u32 %v1533, %v1536
        %v1538 = vrot.slane %v1537, 4
        %v1540 = vshll.u32 %v1325, 16
        %v1542 = vrot.slane %v1540, 5
        %v1543 = vsel %vm581, %v1538, %v1542
        %v1544 = vshrl.u32 %v1325, 16
        %v1546 = vrot.slane %v1544, 4
        %v1547 = vor.u32 %v1546, %v1542
        %v1548 = vrot.slane %v1547, 4
        %v1550 = vshll.u32 %v1326, 16
        %v1552 = vrot.slane %v1550, 5
        %v1553 = vsel %vm581, %v1548, %v1552
        %v1555 = vshrl.u32 %v1327, 16
        %v1557 = vrot.slane %v1555, 4
        %v1558 = vshll.u32 %v1327, 16
        %v1560 = vrot.slane %v1558, 5
        %v1561 = vor.u32 %v1557, %v1560
        %v1562 = vrot.slane %v1561, 4
        %v1564 = vshll.u32 %v1328, 16
        %v1566 = vrot.slane %v1564, 5
        %v1567 = vsel %vm581, %v1562, %v1566
        %v1568 = vshrl.u32 %v1328, 16
        %v1570 = vrot.slane %v1568, 4
        %v1571 = vor.u32 %v1570, %v1566
        %v1572 = vrot.slane %v1571, 4
        %v1574 = vshll.u32 %v1329, 16
        %v1576 = vrot.slane %v1574, 5
        %v1577 = vsel %vm581, %v1572, %v1576
        %v1579 = vshrl.u32 %v1330, 16
        %v1581 = vrot.slane %v1579, 4
        %v1582 = vshll.u32 %v1330, 16
        %v1584 = vrot.slane %v1582, 5
        %v1585 = vor.u32 %v1581, %v1584
        %v1586 = vrot.slane %v1585, 4
        %v1588 = vshll.u32 %v1331, 16
        %v1590 = vrot.slane %v1588, 5
        %v1591 = vsel %vm581, %v1586, %v1590
        %v1592 = vshrl.u32 %v1331, 16
        %v1594 = vrot.slane %v1592, 4
        %v1595 = vor.u32 %v1594, %v1590
        %v1596 = vrot.slane %v1595, 4
        %v1598 = vshll.u32 %v1332, 16
        %v1600 = vrot.slane %v1598, 5
        %v1601 = vsel %vm581, %v1596, %v1600
        %v1603 = vshrl.u32 %v1333, 16
        %v1605 = vrot.slane %v1603, 4
        %v1606 = vshll.u32 %v1333, 16
        %v1608 = vrot.slane %v1606, 5
        %v1609 = vor.u32 %v1605, %v1608
        %v1610 = vrot.slane %v1609, 4
        %v1612 = vshll.u32 %v1334, 16
        %v1614 = vrot.slane %v1612, 5
        %v1615 = vsel %vm581, %v1610, %v1614
        %v1616 = vshrl.u32 %v1334, 16
        %v1618 = vrot.slane %v1616, 4
        %v1619 = vor.u32 %v1618, %v1614
        %v1620 = vrot.slane %v1619, 4
        %v1622 = vshll.u32 %v1335, 16
        %v1624 = vrot.slane %v1622, 5
        %v1625 = vsel %vm581, %v1620, %v1624
        %v1627 = vshrl.u32 %v1336, 16
        %v1629 = vrot.slane %v1627, 4
        %v1630 = vshll.u32 %v1336, 16
        %v1632 = vrot.slane %v1630, 5
        %v1633 = vor.u32 %v1629, %v1632
        %v1634 = vrot.slane %v1633, 4
        %v1636 = vshll.u32 %v1337, 16
        %v1638 = vrot.slane %v1636, 5
        %v1639 = vsel %vm581, %v1634, %v1638
        %v1640 = vshrl.u32 %v1337, 16
        %v1642 = vrot.slane %v1640, 4
        %v1643 = vor.u32 %v1642, %v1638
        %v1644 = vrot.slane %v1643, 4
        %v1646 = vshll.u32 %v1338, 16
        %v1648 = vrot.slane %v1646, 5
        %v1649 = vsel %vm581, %v1644, %v1648
        %v1651 = vshrl.u32 %v1339, 16
        %v1653 = vrot.slane %v1651, 4
        %v1654 = vshll.u32 %v1339, 16
        %v1656 = vrot.slane %v1654, 5
        %v1657 = vor.u32 %v1653, %v1656
        %v1658 = vrot.slane %v1657, 4
        %v1660 = vshll.u32 %v1340, 16
        %v1662 = vrot.slane %v1660, 5
        %v1663 = vsel %vm581, %v1658, %v1662
        %v1664 = vshrl.u32 %v1340, 16
        %v1666 = vrot.slane %v1664, 4
        %v1667 = vor.u32 %v1666, %v1662
        %v1668 = vrot.slane %v1667, 4
        %v1670 = vshll.u32 %v1341, 16
        %v1672 = vrot.slane %v1670, 5
        %v1673 = vsel %vm581, %v1668, %v1672
        %v1675 = vshrl.u32 %v1342, 16
        %v1677 = vrot.slane %v1675, 4
        %v1678 = vshll.u32 %v1342, 16
        %v1680 = vrot.slane %v1678, 5
        %v1681 = vor.u32 %v1677, %v1680
        %v1682 = vrot.slane %v1681, 4
        %v1684 = vshll.u32 %v1343, 16
        %v1686 = vrot.slane %v1684, 5
        %v1687 = vsel %vm581, %v1682, %v1686
        %v1688 = vshrl.u32 %v1343, 16
        %v1690 = vrot.slane %v1688, 4
        %v1691 = vor.u32 %v1690, %v1686
        %v1692 = vrot.slane %v1691, 4
        %v1694 = vshll.u32 %v1344, 16
        %v1696 = vrot.slane %v1694, 5
        %v1697 = vsel %vm581, %v1692, %v1696
        %v1699 = vshrl.u32 %v1345, 16
        %v1701 = vrot.slane %v1699, 4
        %v1702 = vshll.u32 %v1345, 16
        %v1704 = vrot.slane %v1702, 5
        %v1705 = vor.u32 %v1701, %v1704
        %v1706 = vrot.slane %v1705, 4
        %v1708 = vshll.u32 %v1346, 16
        %v1710 = vrot.slane %v1708, 5
        %v1711 = vsel %vm581, %v1706, %v1710
        %v1712 = vshrl.u32 %v1346, 16
        %v1714 = vrot.slane %v1712, 4
        %v1715 = vor.u32 %v1714, %v1710
        %v1716 = vrot.slane %v1715, 4
        %v1718 = vshll.u32 %v1347, 16
        %v1720 = vrot.slane %v1718, 5
        %v1721 = vsel %vm581, %v1716, %v1720
        %s1722 = scalar_lea.vmem %s540, 8
        %v1723 = vld [vmem:[%s1722] sm:$0x3]
        %v1724 = vunpack.c.l.b16 %v1543
        %v1725 = vunpack.c.l.b16 %v1553
        %v1726 = vunpack.c.l.b16 %v1567
        %v1727 = vunpack.c.l.b16 %v1577
        %v1728 = vunpack.c.l.b16 %v1591
        %v1729 = vunpack.c.l.b16 %v1601
        %v1730 = vunpack.c.l.b16 %v1615
        %v1731 = vunpack.c.l.b16 %v1625
        %v1732 = vunpack.c.l.b16 %v1639
        %v1733 = vunpack.c.l.b16 %v1649
        %v1734 = vunpack.c.l.b16 %v1663
        %v1735 = vunpack.c.l.b16 %v1673
        %v1736 = vunpack.c.l.b16 %v1687
        %v1737 = vunpack.c.l.b16 %v1697
        %v1738 = vunpack.c.l.b16 %v1711
        %v1739 = vunpack.c.l.b16 %v1721
        %v1740 = vpack.c.b16 %v1725, %v1724
        %v1741 = vpack.c.b16 %v1727, %v1726
        %v1742 = vpack.c.b16 %v1729, %v1728
        %v1743 = vpack.c.b16 %v1731, %v1730
        %v1744 = vpack.c.b16 %v1733, %v1732
        %v1745 = vpack.c.b16 %v1735, %v1734
        %v1746 = vpack.c.b16 %v1737, %v1736
        %v1747 = vpack.c.b16 %v1739, %v1738
        %v1749 = vsel %vm800, %v1740, 0
        %v1752 = vsel %vm800, %v1741, 0
        %v1755 = vsel %vm800, %v1742, 0
        %v1758 = vsel %vm800, %v1743, 0
        %v1761 = vsel %vm800, %v1744, 0
        %v1764 = vsel %vm800, %v1745, 0
        %v1767 = vsel %vm800, %v1746, 0
        %v1770 = vsel %vm800, %v1747, 0
        %v1773 = vsel %vm825, %v1723, 0
        %1775 = vmatprep.subr.bf16.mxu0 0
        %1776 = vmatpush1.bf16.msra.mxu0 0
        %1777 = vmatprep.subr.bf16.mxu0 0
        %1778 = vmatpush1.bf16.msra.mxu0 0
        %1779 = vmatprep.subr.bf16.mxu0 0
        %1780 = vmatpush1.bf16.msra.mxu0 0
        %1781 = vmatprep.subr.bf16.mxu0 0
        %1782 = vmatpush1.bf16.msra.mxu0 0
        %1783 = vmatprep.subr.bf16.mxu0 0
        %1784 = vmatpush1.bf16.msra.mxu0 0
        %1785 = vmatprep.subr.bf16.mxu0 0
        %1786 = vmatpush1.bf16.msra.mxu0 0
        %1787 = vmatprep.subr.bf16.mxu0 0
        %1788 = vmatpush1.bf16.msra.mxu0 0
        %1789 = vmatprep.subr.bf16.mxu0 0
        %1790 = vmatpush1.bf16.msra.mxu0 %v1773
        %1791 = vmatprep.subr.bf16.mxu0 0
        %1792 = vmatpush2.bf16.msra.mxu0 0
        %1793 = vmatprep.subr.bf16.mxu0 0
        %1794 = vmatpush2.bf16.msra.mxu0 0
        %1795 = vmatprep.subr.bf16.mxu0 0
        %1796 = vmatpush2.bf16.msra.mxu0 0
        %1797 = vmatprep.subr.bf16.mxu0 0
        %1798 = vmatpush2.bf16.msra.mxu0 0
        %1799 = vmatprep.subr.bf16.mxu0 0
        %1800 = vmatpush2.bf16.msra.mxu0 0
        %1801 = vmatprep.subr.bf16.mxu0 0
        %1802 = vmatpush2.bf16.msra.mxu0 0
        %1803 = vmatprep.subr.bf16.mxu0 0
        %1804 = vmatpush2.bf16.msra.mxu0 0
        %1805 = vmatprep.subr.bf16.mxu0 0
        %1806 = vmatpush2.bf16.msra.mxu0 0
        %1807 = vmatprep.mubr.bf16.mxu0 0
        %1808 = vmatmul.mubr.bf16.gmra.mxu0 %v1749
        %v1809 = vpop.f32.mrf.mxu0
        %v1810 = vadd.f32 0.0, %v1809
        %v1811 = vpop.f32.mrf.mxu0
        %v1812 = vpop.f32.mrf.mxu0
        %v1813 = vadd.f32 0.0, %v1812
        %v1814 = vpop.f32.mrf.mxu0
        %1815 = vmatprep.mubr.bf16.mxu0 0
        %1816 = vmatmul.mubr.bf16.gmra.mxu0 %v1752
        %v1817 = vpop.f32.mrf.mxu0
        %v1818 = vadd.f32 0.0, %v1817
        %v1819 = vpop.f32.mrf.mxu0
        %v1820 = vpop.f32.mrf.mxu0
        %v1821 = vadd.f32 0.0, %v1820
        %v1822 = vpop.f32.mrf.mxu0
        %1823 = vmatprep.mubr.bf16.mxu0 0
        %1824 = vmatmul.mubr.bf16.gmra.mxu0 %v1755
        %v1825 = vpop.f32.mrf.mxu0
        %v1826 = vadd.f32 0.0, %v1825
        %v1827 = vpop.f32.mrf.mxu0
        %v1828 = vpop.f32.mrf.mxu0
        %v1829 = vadd.f32 0.0, %v1828
        %v1830 = vpop.f32.mrf.mxu0
        %1831 = vmatprep.mubr.bf16.mxu0 0
        %1832 = vmatmul.mubr.bf16.gmra.mxu0 %v1758
        %v1833 = vpop.f32.mrf.mxu0
        %v1834 = vadd.f32 0.0, %v1833
        %v1835 = vpop.f32.mrf.mxu0
        %v1836 = vpop.f32.mrf.mxu0
        %v1837 = vadd.f32 0.0, %v1836
        %v1838 = vpop.f32.mrf.mxu0
        %1839 = vmatprep.mubr.bf16.mxu0 0
        %1840 = vmatmul.mubr.bf16.gmra.mxu0 %v1761
        %v1841 = vpop.f32.mrf.mxu0
        %v1842 = vadd.f32 0.0, %v1841
        %v1843 = vpop.f32.mrf.mxu0
        %v1844 = vpop.f32.mrf.mxu0
        %v1845 = vadd.f32 0.0, %v1844
        %v1846 = vpop.f32.mrf.mxu0
        %1847 = vmatprep.mubr.bf16.mxu0 0
        %1848 = vmatmul.mubr.bf16.gmra.mxu0 %v1764
        %v1849 = vpop.f32.mrf.mxu0
        %v1850 = vadd.f32 0.0, %v1849
        %v1851 = vpop.f32.mrf.mxu0
        %v1852 = vpop.f32.mrf.mxu0
        %v1853 = vadd.f32 0.0, %v1852
        %v1854 = vpop.f32.mrf.mxu0
        %1855 = vmatprep.mubr.bf16.mxu0 0
        %1856 = vmatmul.mubr.bf16.gmra.mxu0 %v1767
        %v1857 = vpop.f32.mrf.mxu0
        %v1858 = vadd.f32 0.0, %v1857
        %v1859 = vpop.f32.mrf.mxu0
        %v1860 = vpop.f32.mrf.mxu0
        %v1861 = vadd.f32 0.0, %v1860
        %v1862 = vpop.f32.mrf.mxu0
        %1863 = vmatprep.mubr.bf16.mxu0 0
        %1864 = vmatmul.mubr.bf16.gmra.mxu0 %v1770
        %v1865 = vpop.f32.mrf.mxu0
        %v1866 = vadd.f32 0.0, %v1865
        %v1867 = vpop.f32.mrf.mxu0
        %v1868 = vpop.f32.mrf.mxu0
        %v1869 = vadd.f32 0.0, %v1868
        %v1870 = vpop.f32.mrf.mxu0
        %1871 = vdwg.mxu0
        %v1872 = vadd.f32 %v1514, %v1810
        %v1873 = vadd.f32 %v1515, %v1813
        %v1874 = vadd.f32 %v1516, %v1818
        %v1875 = vadd.f32 %v1517, %v1821
        %v1876 = vadd.f32 %v1518, %v1826
        %v1877 = vadd.f32 %v1519, %v1829
        %v1878 = vadd.f32 %v1520, %v1834
        %v1879 = vadd.f32 %v1521, %v1837
        %v1880 = vadd.f32 %v1522, %v1842
        %v1881 = vadd.f32 %v1523, %v1845
        %v1882 = vadd.f32 %v1524, %v1850
        %v1883 = vadd.f32 %v1525, %v1853
        %v1884 = vadd.f32 %v1526, %v1858
        %v1885 = vadd.f32 %v1527, %v1861
        %v1886 = vadd.f32 %v1528, %v1866
        %v1887 = vadd.f32 %v1529, %v1869
        %v1896 = vrot.slane %v1324, 5
        %v1897 = vrot.slane %v1896, 4
        %v1898 = vrot.slane %v1325, 5
        %v1899 = vsel %vm1100, %v1897, %v1898
        %v1900 = vrot.slane %v1898, 4
        %v1901 = vrot.slane %v1326, 5
        %v1902 = vsel %vm1100, %v1900, %v1901
        %v1903 = vrot.slane %v1327, 5
        %v1904 = vrot.slane %v1903, 4
        %v1905 = vrot.slane %v1328, 5
        %v1906 = vsel %vm1100, %v1904, %v1905
        %v1907 = vrot.slane %v1905, 4
        %v1908 = vrot.slane %v1329, 5
        %v1909 = vsel %vm1100, %v1907, %v1908
        %v1910 = vrot.slane %v1330, 5
        %v1911 = vrot.slane %v1910, 4
        %v1912 = vrot.slane %v1331, 5
        %v1913 = vsel %vm1100, %v1911, %v1912
        %v1914 = vrot.slane %v1912, 4
        %v1915 = vrot.slane %v1332, 5
        %v1916 = vsel %vm1100, %v1914, %v1915
        %v1917 = vrot.slane %v1333, 5
        %v1918 = vrot.slane %v1917, 4
        %v1919 = vrot.slane %v1334, 5
        %v1920 = vsel %vm1100, %v1918, %v1919
        %v1921 = vrot.slane %v1919, 4
        %v1922 = vrot.slane %v1335, 5
        %v1923 = vsel %vm1100, %v1921, %v1922
        %v1924 = vrot.slane %v1336, 5
        %v1925 = vrot.slane %v1924, 4
        %v1926 = vrot.slane %v1337, 5
        %v1927 = vsel %vm1100, %v1925, %v1926
        %v1928 = vrot.slane %v1926, 4
        %v1929 = vrot.slane %v1338, 5
        %v1930 = vsel %vm1100, %v1928, %v1929
        %v1931 = vrot.slane %v1339, 5
        %v1932 = vrot.slane %v1931, 4
        %v1933 = vrot.slane %v1340, 5
        %v1934 = vsel %vm1100, %v1932, %v1933
        %v1935 = vrot.slane %v1933, 4
        %v1936 = vrot.slane %v1341, 5
        %v1937 = vsel %vm1100, %v1935, %v1936
        %v1938 = vrot.slane %v1342, 5
        %v1939 = vrot.slane %v1938, 4
        %v1940 = vrot.slane %v1343, 5
        %v1941 = vsel %vm1100, %v1939, %v1940
        %v1942 = vrot.slane %v1940, 4
        %v1943 = vrot.slane %v1344, 5
        %v1944 = vsel %vm1100, %v1942, %v1943
        %v1945 = vrot.slane %v1345, 5
        %v1946 = vrot.slane %v1945, 4
        %v1947 = vrot.slane %v1346, 5
        %v1948 = vsel %vm1100, %v1946, %v1947
        %v1949 = vrot.slane %v1947, 4
        %v1950 = vrot.slane %v1347, 5
        %v1951 = vsel %vm1100, %v1949, %v1950
        %s1952 = scalar_lea.vmem %s540, 10
        %v1953 = vld [vmem:[%s1952] sm:$0x3]
        %v1954 = vunpack.c.l.b16 %v1899
        %v1955 = vunpack.c.l.b16 %v1902
        %v1956 = vunpack.c.l.b16 %v1906
        %v1957 = vunpack.c.l.b16 %v1909
        %v1958 = vunpack.c.l.b16 %v1913
        %v1959 = vunpack.c.l.b16 %v1916
        %v1960 = vunpack.c.l.b16 %v1920
        %v1961 = vunpack.c.l.b16 %v1923
        %v1962 = vunpack.c.l.b16 %v1927
        %v1963 = vunpack.c.l.b16 %v1930
        %v1964 = vunpack.c.l.b16 %v1934
        %v1965 = vunpack.c.l.b16 %v1937
        %v1966 = vunpack.c.l.b16 %v1941
        %v1967 = vunpack.c.l.b16 %v1944
        %v1968 = vunpack.c.l.b16 %v1948
        %v1969 = vunpack.c.l.b16 %v1951
        %v1970 = vpack.c.b16 %v1955, %v1954
        %v1971 = vpack.c.b16 %v1957, %v1956
        %v1972 = vpack.c.b16 %v1959, %v1958
        %v1973 = vpack.c.b16 %v1961, %v1960
        %v1974 = vpack.c.b16 %v1963, %v1962
        %v1975 = vpack.c.b16 %v1965, %v1964
        %v1976 = vpack.c.b16 %v1967, %v1966
        %v1977 = vpack.c.b16 %v1969, %v1968
        %v1979 = vsel %vm800, %v1970, 0
        %v1982 = vsel %vm800, %v1971, 0
        %v1985 = vsel %vm800, %v1972, 0
        %v1988 = vsel %vm800, %v1973, 0
        %v1991 = vsel %vm800, %v1974, 0
        %v1994 = vsel %vm800, %v1975, 0
        %v1997 = vsel %vm800, %v1976, 0
        %v2000 = vsel %vm800, %v1977, 0
        %v2003 = vsel %vm825, %v1953, 0
        %2005 = vmatprep.subr.bf16.mxu0 0
        %2006 = vmatpush1.bf16.msra.mxu0 0
        %2007 = vmatprep.subr.bf16.mxu0 0
        %2008 = vmatpush1.bf16.msra.mxu0 0
        %2009 = vmatprep.subr.bf16.mxu0 0
        %2010 = vmatpush1.bf16.msra.mxu0 0
        %2011 = vmatprep.subr.bf16.mxu0 0
        %2012 = vmatpush1.bf16.msra.mxu0 0
        %2013 = vmatprep.subr.bf16.mxu0 0
        %2014 = vmatpush1.bf16.msra.mxu0 0
        %2015 = vmatprep.subr.bf16.mxu0 0
        %2016 = vmatpush1.bf16.msra.mxu0 0
        %2017 = vmatprep.subr.bf16.mxu0 0
        %2018 = vmatpush1.bf16.msra.mxu0 0
        %2019 = vmatprep.subr.bf16.mxu0 0
        %2020 = vmatpush1.bf16.msra.mxu0 %v2003
        %2021 = vmatprep.subr.bf16.mxu0 0
        %2022 = vmatpush2.bf16.msra.mxu0 0
        %2023 = vmatprep.subr.bf16.mxu0 0
        %2024 = vmatpush2.bf16.msra.mxu0 0
        %2025 = vmatprep.subr.bf16.mxu0 0
        %2026 = vmatpush2.bf16.msra.mxu0 0
        %2027 = vmatprep.subr.bf16.mxu0 0
        %2028 = vmatpush2.bf16.msra.mxu0 0
        %2029 = vmatprep.subr.bf16.mxu0 0
        %2030 = vmatpush2.bf16.msra.mxu0 0
        %2031 = vmatprep.subr.bf16.mxu0 0
        %2032 = vmatpush2.bf16.msra.mxu0 0
        %2033 = vmatprep.subr.bf16.mxu0 0
        %2034 = vmatpush2.bf16.msra.mxu0 0
        %2035 = vmatprep.subr.bf16.mxu0 0
        %2036 = vmatpush2.bf16.msra.mxu0 0
        %2037 = vmatprep.mubr.bf16.mxu0 0
        %2038 = vmatmul.mubr.bf16.gmra.mxu0 %v1979
        %v2039 = vpop.f32.mrf.mxu0
        %v2040 = vadd.f32 0.0, %v2039
        %v2041 = vpop.f32.mrf.mxu0
        %v2042 = vpop.f32.mrf.mxu0
        %v2043 = vadd.f32 0.0, %v2042
        %v2044 = vpop.f32.mrf.mxu0
        %2045 = vmatprep.mubr.bf16.mxu0 0
        %2046 = vmatmul.mubr.bf16.gmra.mxu0 %v1982
        %v2047 = vpop.f32.mrf.mxu0
        %v2048 = vadd.f32 0.0, %v2047
        %v2049 = vpop.f32.mrf.mxu0
        %v2050 = vpop.f32.mrf.mxu0
        %v2051 = vadd.f32 0.0, %v2050
        %v2052 = vpop.f32.mrf.mxu0
        %2053 = vmatprep.mubr.bf16.mxu0 0
        %2054 = vmatmul.mubr.bf16.gmra.mxu0 %v1985
        %v2055 = vpop.f32.mrf.mxu0
        %v2056 = vadd.f32 0.0, %v2055
        %v2057 = vpop.f32.mrf.mxu0
        %v2058 = vpop.f32.mrf.mxu0
        %v2059 = vadd.f32 0.0, %v2058
        %v2060 = vpop.f32.mrf.mxu0
        %2061 = vmatprep.mubr.bf16.mxu0 0
        %2062 = vmatmul.mubr.bf16.gmra.mxu0 %v1988
        %v2063 = vpop.f32.mrf.mxu0
        %v2064 = vadd.f32 0.0, %v2063
        %v2065 = vpop.f32.mrf.mxu0
        %v2066 = vpop.f32.mrf.mxu0
        %v2067 = vadd.f32 0.0, %v2066
        %v2068 = vpop.f32.mrf.mxu0
        %2069 = vmatprep.mubr.bf16.mxu0 0
        %2070 = vmatmul.mubr.bf16.gmra.mxu0 %v1991
        %v2071 = vpop.f32.mrf.mxu0
        %v2072 = vadd.f32 0.0, %v2071
        %v2073 = vpop.f32.mrf.mxu0
        %v2074 = vpop.f32.mrf.mxu0
        %v2075 = vadd.f32 0.0, %v2074
        %v2076 = vpop.f32.mrf.mxu0
        %2077 = vmatprep.mubr.bf16.mxu0 0
        %2078 = vmatmul.mubr.bf16.gmra.mxu0 %v1994
        %v2079 = vpop.f32.mrf.mxu0
        %v2080 = vadd.f32 0.0, %v2079
        %v2081 = vpop.f32.mrf.mxu0
        %v2082 = vpop.f32.mrf.mxu0
        %v2083 = vadd.f32 0.0, %v2082
        %v2084 = vpop.f32.mrf.mxu0
        %2085 = vmatprep.mubr.bf16.mxu0 0
        %2086 = vmatmul.mubr.bf16.gmra.mxu0 %v1997
        %v2087 = vpop.f32.mrf.mxu0
        %v2088 = vadd.f32 0.0, %v2087
        %v2089 = vpop.f32.mrf.mxu0
        %v2090 = vpop.f32.mrf.mxu0
        %v2091 = vadd.f32 0.0, %v2090
        %v2092 = vpop.f32.mrf.mxu0
        %2093 = vmatprep.mubr.bf16.mxu0 0
        %2094 = vmatmul.mubr.bf16.gmra.mxu0 %v2000
        %v2095 = vpop.f32.mrf.mxu0
        %v2096 = vadd.f32 0.0, %v2095
        %v2097 = vpop.f32.mrf.mxu0
        %v2098 = vpop.f32.mrf.mxu0
        %v2099 = vadd.f32 0.0, %v2098
        %v2100 = vpop.f32.mrf.mxu0
        %2101 = vdwg.mxu0
        %v2102 = vadd.f32 %v1872, %v2040
        %v2103 = vadd.f32 %v1873, %v2043
        %v2104 = vadd.f32 %v1874, %v2048
        %v2105 = vadd.f32 %v1875, %v2051
        %v2106 = vadd.f32 %v1876, %v2056
        %v2107 = vadd.f32 %v1877, %v2059
        %v2108 = vadd.f32 %v1878, %v2064
        %v2109 = vadd.f32 %v1879, %v2067
        %v2110 = vadd.f32 %v1880, %v2072
        %v2111 = vadd.f32 %v1881, %v2075
        %v2112 = vadd.f32 %v1882, %v2080
        %v2113 = vadd.f32 %v1883, %v2083
        %v2114 = vadd.f32 %v1884, %v2088
        %v2115 = vadd.f32 %v1885, %v2091
        %v2116 = vadd.f32 %v1886, %v2096
        %v2117 = vadd.f32 %v1887, %v2099
        %s2118 = scalar_lea.vmem %s505, 192 [#allocation2]
        %v2119 = vld [vmem:[%s2118] sm:$0xf]
        %v2120 = vld [vmem:[%s2118 + $0x4] sm:$0xf]
        %v2121 = vld [vmem:[%s2118 + $0x8] sm:$0x1]
        %v2122 = vld [vmem:[%s2118 + $0xc] sm:$0xf]
        %v2123 = vld [vmem:[%s2118 + $0x10] sm:$0xf]
        %v2124 = vld [vmem:[%s2118 + $0x14] sm:$0x1]
        %v2125 = vld [vmem:[%s2118 + $0x18] sm:$0xf]
        %v2126 = vld [vmem:[%s2118 + $0x1c] sm:$0xf]
        %v2127 = vld [vmem:[%s2118 + $0x20] sm:$0x1]
        %v2128 = vld [vmem:[%s2118 + $0x24] sm:$0xf]
        %v2129 = vld [vmem:[%s2118 + $0x28] sm:$0xf]
        %v2130 = vld [vmem:[%s2118 + $0x2c] sm:$0x1]
        %v2131 = vld [vmem:[%s2118 + $0x30] sm:$0xf]
        %v2132 = vld [vmem:[%s2118 + $0x34] sm:$0xf]
        %v2133 = vld [vmem:[%s2118 + $0x38] sm:$0x1]
        %v2134 = vld [vmem:[%s2118 + $0x3c] sm:$0xf]
        %v2135 = vld [vmem:[%s2118 + $0x40] sm:$0xf]
        %v2136 = vld [vmem:[%s2118 + $0x44] sm:$0x1]
        %v2137 = vld [vmem:[%s2118 + $0x48] sm:$0xf]
        %v2138 = vld [vmem:[%s2118 + $0x4c] sm:$0xf]
        %v2139 = vld [vmem:[%s2118 + $0x50] sm:$0x1]
        %v2140 = vld [vmem:[%s2118 + $0x54] sm:$0xf]
        %v2141 = vld [vmem:[%s2118 + $0x58] sm:$0xf]
        %v2142 = vld [vmem:[%s2118 + $0x5c] sm:$0x1]
        %s2143 = scalar_lea.vmem %s540, 12
        %v2144 = vld [vmem:[%s2143] sm:$0x3]
        %v2161 = vunpack.c.l.b16 %v2119
        %v2162 = vunpack.c.l.b16 %v2120
        %v2163 = vunpack.c.l.b16 %v2122
        %v2164 = vunpack.c.l.b16 %v2123
        %v2165 = vunpack.c.l.b16 %v2125
        %v2166 = vunpack.c.l.b16 %v2126
        %v2167 = vunpack.c.l.b16 %v2128
        %v2168 = vunpack.c.l.b16 %v2129
        %v2169 = vunpack.c.l.b16 %v2131
        %v2170 = vunpack.c.l.b16 %v2132
        %v2171 = vunpack.c.l.b16 %v2134
        %v2172 = vunpack.c.l.b16 %v2135
        %v2173 = vunpack.c.l.b16 %v2137
        %v2174 = vunpack.c.l.b16 %v2138
        %v2175 = vunpack.c.l.b16 %v2140
        %v2176 = vunpack.c.l.b16 %v2141
        %v2177 = vpack.c.b16 %v2162, %v2161
        %v2178 = vpack.c.b16 %v2164, %v2163
        %v2179 = vpack.c.b16 %v2166, %v2165
        %v2180 = vpack.c.b16 %v2168, %v2167
        %v2181 = vpack.c.b16 %v2170, %v2169
        %v2182 = vpack.c.b16 %v2172, %v2171
        %v2183 = vpack.c.b16 %v2174, %v2173
        %v2184 = vpack.c.b16 %v2176, %v2175
        %v2186 = vsel %vm800, %v2177, 0
        %v2189 = vsel %vm800, %v2178, 0
        %v2192 = vsel %vm800, %v2179, 0
        %v2195 = vsel %vm800, %v2180, 0
        %v2198 = vsel %vm800, %v2181, 0
        %v2201 = vsel %vm800, %v2182, 0
        %v2204 = vsel %vm800, %v2183, 0
        %v2207 = vsel %vm800, %v2184, 0
        %v2210 = vsel %vm825, %v2144, 0
        %2212 = vmatprep.subr.bf16.mxu0 0
        %2213 = vmatpush1.bf16.msra.mxu0 0
        %2214 = vmatprep.subr.bf16.mxu0 0
        %2215 = vmatpush1.bf16.msra.mxu0 0
        %2216 = vmatprep.subr.bf16.mxu0 0
        %2217 = vmatpush1.bf16.msra.mxu0 0
        %2218 = vmatprep.subr.bf16.mxu0 0
        %2219 = vmatpush1.bf16.msra.mxu0 0
        %2220 = vmatprep.subr.bf16.mxu0 0
        %2221 = vmatpush1.bf16.msra.mxu0 0
        %2222 = vmatprep.subr.bf16.mxu0 0
        %2223 = vmatpush1.bf16.msra.mxu0 0
        %2224 = vmatprep.subr.bf16.mxu0 0
        %2225 = vmatpush1.bf16.msra.mxu0 0
        %2226 = vmatprep.subr.bf16.mxu0 0
        %2227 = vmatpush1.bf16.msra.mxu0 %v2210
        %2228 = vmatprep.subr.bf16.mxu0 0
        %2229 = vmatpush2.bf16.msra.mxu0 0
        %2230 = vmatprep.subr.bf16.mxu0 0
        %2231 = vmatpush2.bf16.msra.mxu0 0
        %2232 = vmatprep.subr.bf16.mxu0 0
        %2233 = vmatpush2.bf16.msra.mxu0 0
        %2234 = vmatprep.subr.bf16.mxu0 0
        %2235 = vmatpush2.bf16.msra.mxu0 0
        %2236 = vmatprep.subr.bf16.mxu0 0
        %2237 = vmatpush2.bf16.msra.mxu0 0
        %2238 = vmatprep.subr.bf16.mxu0 0
        %2239 = vmatpush2.bf16.msra.mxu0 0
        %2240 = vmatprep.subr.bf16.mxu0 0
        %2241 = vmatpush2.bf16.msra.mxu0 0
        %2242 = vmatprep.subr.bf16.mxu0 0
        %2243 = vmatpush2.bf16.msra.mxu0 0
        %2244 = vmatprep.mubr.bf16.mxu0 0
        %2245 = vmatmul.mubr.bf16.gmra.mxu0 %v2186
        %v2246 = vpop.f32.mrf.mxu0
        %v2247 = vadd.f32 0.0, %v2246
        %v2248 = vpop.f32.mrf.mxu0
        %v2249 = vpop.f32.mrf.mxu0
        %v2250 = vadd.f32 0.0, %v2249
        %v2251 = vpop.f32.mrf.mxu0
        %2252 = vmatprep.mubr.bf16.mxu0 0
        %2253 = vmatmul.mubr.bf16.gmra.mxu0 %v2189
        %v2254 = vpop.f32.mrf.mxu0
        %v2255 = vadd.f32 0.0, %v2254
        %v2256 = vpop.f32.mrf.mxu0
        %v2257 = vpop.f32.mrf.mxu0
        %v2258 = vadd.f32 0.0, %v2257
        %v2259 = vpop.f32.mrf.mxu0
        %2260 = vmatprep.mubr.bf16.mxu0 0
        %2261 = vmatmul.mubr.bf16.gmra.mxu0 %v2192
        %v2262 = vpop.f32.mrf.mxu0
        %v2263 = vadd.f32 0.0, %v2262
        %v2264 = vpop.f32.mrf.mxu0
        %v2265 = vpop.f32.mrf.mxu0
        %v2266 = vadd.f32 0.0, %v2265
        %v2267 = vpop.f32.mrf.mxu0
        %2268 = vmatprep.mubr.bf16.mxu0 0
        %2269 = vmatmul.mubr.bf16.gmra.mxu0 %v2195
        %v2270 = vpop.f32.mrf.mxu0
        %v2271 = vadd.f32 0.0, %v2270
        %v2272 = vpop.f32.mrf.mxu0
        %v2273 = vpop.f32.mrf.mxu0
        %v2274 = vadd.f32 0.0, %v2273
        %v2275 = vpop.f32.mrf.mxu0
        %2276 = vmatprep.mubr.bf16.mxu0 0
        %2277 = vmatmul.mubr.bf16.gmra.mxu0 %v2198
        %v2278 = vpop.f32.mrf.mxu0
        %v2279 = vadd.f32 0.0, %v2278
        %v2280 = vpop.f32.mrf.mxu0
        %v2281 = vpop.f32.mrf.mxu0
        %v2282 = vadd.f32 0.0, %v2281
        %v2283 = vpop.f32.mrf.mxu0
        %2284 = vmatprep.mubr.bf16.mxu0 0
        %2285 = vmatmul.mubr.bf16.gmra.mxu0 %v2201
        %v2286 = vpop.f32.mrf.mxu0
        %v2287 = vadd.f32 0.0, %v2286
        %v2288 = vpop.f32.mrf.mxu0
        %v2289 = vpop.f32.mrf.mxu0
        %v2290 = vadd.f32 0.0, %v2289
        %v2291 = vpop.f32.mrf.mxu0
        %2292 = vmatprep.mubr.bf16.mxu0 0
        %2293 = vmatmul.mubr.bf16.gmra.mxu0 %v2204
        %v2294 = vpop.f32.mrf.mxu0
        %v2295 = vadd.f32 0.0, %v2294
        %v2296 = vpop.f32.mrf.mxu0
        %v2297 = vpop.f32.mrf.mxu0
        %v2298 = vadd.f32 0.0, %v2297
        %v2299 = vpop.f32.mrf.mxu0
        %2300 = vmatprep.mubr.bf16.mxu0 0
        %2301 = vmatmul.mubr.bf16.gmra.mxu0 %v2207
        %v2302 = vpop.f32.mrf.mxu0
        %v2303 = vadd.f32 0.0, %v2302
        %v2304 = vpop.f32.mrf.mxu0
        %v2305 = vpop.f32.mrf.mxu0
        %v2306 = vadd.f32 0.0, %v2305
        %v2307 = vpop.f32.mrf.mxu0
        %2308 = vdwg.mxu0
        %v2309 = vadd.f32 %v2102, %v2247
        %v2310 = vadd.f32 %v2103, %v2250
        %v2311 = vadd.f32 %v2104, %v2255
        %v2312 = vadd.f32 %v2105, %v2258
        %v2313 = vadd.f32 %v2106, %v2263
        %v2314 = vadd.f32 %v2107, %v2266
        %v2315 = vadd.f32 %v2108, %v2271
        %v2316 = vadd.f32 %v2109, %v2274
        %v2317 = vadd.f32 %v2110, %v2279
        %v2318 = vadd.f32 %v2111, %v2282
        %v2319 = vadd.f32 %v2112, %v2287
        %v2320 = vadd.f32 %v2113, %v2290
        %v2321 = vadd.f32 %v2114, %v2295
        %v2322 = vadd.f32 %v2115, %v2298
        %v2323 = vadd.f32 %v2116, %v2303
        %v2324 = vadd.f32 %v2117, %v2306
        %v2326 = vshrl.u32 %v2119, 16
        %v2328 = vrot.slane %v2326, 4
        %v2329 = vshll.u32 %v2119, 16
        %v2331 = vrot.slane %v2329, 5
        %v2332 = vor.u32 %v2328, %v2331
        %v2333 = vrot.slane %v2332, 4
        %v2335 = vshll.u32 %v2120, 16
        %v2337 = vrot.slane %v2335, 5
        %v2338 = vsel %vm581, %v2333, %v2337
        %v2339 = vshrl.u32 %v2120, 16
        %v2341 = vrot.slane %v2339, 4
        %v2342 = vor.u32 %v2341, %v2337
        %v2343 = vrot.slane %v2342, 4
        %v2345 = vshll.u32 %v2121, 16
        %v2347 = vrot.slane %v2345, 5
        %v2348 = vsel %vm581, %v2343, %v2347
        %v2350 = vshrl.u32 %v2122, 16
        %v2352 = vrot.slane %v2350, 4
        %v2353 = vshll.u32 %v2122, 16
        %v2355 = vrot.slane %v2353, 5
        %v2356 = vor.u32 %v2352, %v2355
        %v2357 = vrot.slane %v2356, 4
        %v2359 = vshll.u32 %v2123, 16
        %v2361 = vrot.slane %v2359, 5
        %v2362 = vsel %vm581, %v2357, %v2361
        %v2363 = vshrl.u32 %v2123, 16
        %v2365 = vrot.slane %v2363, 4
        %v2366 = vor.u32 %v2365, %v2361
        %v2367 = vrot.slane %v2366, 4
        %v2369 = vshll.u32 %v2124, 16
        %v2371 = vrot.slane %v2369, 5
        %v2372 = vsel %vm581, %v2367, %v2371
        %v2374 = vshrl.u32 %v2125, 16
        %v2376 = vrot.slane %v2374, 4
        %v2377 = vshll.u32 %v2125, 16
        %v2379 = vrot.slane %v2377, 5
        %v2380 = vor.u32 %v2376, %v2379
        %v2381 = vrot.slane %v2380, 4
        %v2383 = vshll.u32 %v2126, 16
        %v2385 = vrot.slane %v2383, 5
        %v2386 = vsel %vm581, %v2381, %v2385
        %v2387 = vshrl.u32 %v2126, 16
        %v2389 = vrot.slane %v2387, 4
        %v2390 = vor.u32 %v2389, %v2385
        %v2391 = vrot.slane %v2390, 4
        %v2393 = vshll.u32 %v2127, 16
        %v2395 = vrot.slane %v2393, 5
        %v2396 = vsel %vm581, %v2391, %v2395
        %v2398 = vshrl.u32 %v2128, 16
        %v2400 = vrot.slane %v2398, 4
        %v2401 = vshll.u32 %v2128, 16
        %v2403 = vrot.slane %v2401, 5
        %v2404 = vor.u32 %v2400, %v2403
        %v2405 = vrot.slane %v2404, 4
        %v2407 = vshll.u32 %v2129, 16
        %v2409 = vrot.slane %v2407, 5
        %v2410 = vsel %vm581, %v2405, %v2409
        %v2411 = vshrl.u32 %v2129, 16
        %v2413 = vrot.slane %v2411, 4
        %v2414 = vor.u32 %v2413, %v2409
        %v2415 = vrot.slane %v2414, 4
        %v2417 = vshll.u32 %v2130, 16
        %v2419 = vrot.slane %v2417, 5
        %v2420 = vsel %vm581, %v2415, %v2419
        %v2422 = vshrl.u32 %v2131, 16
        %v2424 = vrot.slane %v2422, 4
        %v2425 = vshll.u32 %v2131, 16
        %v2427 = vrot.slane %v2425, 5
        %v2428 = vor.u32 %v2424, %v2427
        %v2429 = vrot.slane %v2428, 4
        %v2431 = vshll.u32 %v2132, 16
        %v2433 = vrot.slane %v2431, 5
        %v2434 = vsel %vm581, %v2429, %v2433
        %v2435 = vshrl.u32 %v2132, 16
        %v2437 = vrot.slane %v2435, 4
        %v2438 = vor.u32 %v2437, %v2433
        %v2439 = vrot.slane %v2438, 4
        %v2441 = vshll.u32 %v2133, 16
        %v2443 = vrot.slane %v2441, 5
        %v2444 = vsel %vm581, %v2439, %v2443
        %v2446 = vshrl.u32 %v2134, 16
        %v2448 = vrot.slane %v2446, 4
        %v2449 = vshll.u32 %v2134, 16
        %v2451 = vrot.slane %v2449, 5
        %v2452 = vor.u32 %v2448, %v2451
        %v2453 = vrot.slane %v2452, 4
        %v2455 = vshll.u32 %v2135, 16
        %v2457 = vrot.slane %v2455, 5
        %v2458 = vsel %vm581, %v2453, %v2457
        %v2459 = vshrl.u32 %v2135, 16
        %v2461 = vrot.slane %v2459, 4
        %v2462 = vor.u32 %v2461, %v2457
        %v2463 = vrot.slane %v2462, 4
        %v2465 = vshll.u32 %v2136, 16
        %v2467 = vrot.slane %v2465, 5
        %v2468 = vsel %vm581, %v2463, %v2467
        %v2470 = vshrl.u32 %v2137, 16
        %v2472 = vrot.slane %v2470, 4
        %v2473 = vshll.u32 %v2137, 16
        %v2475 = vrot.slane %v2473, 5
        %v2476 = vor.u32 %v2472, %v2475
        %v2477 = vrot.slane %v2476, 4
        %v2479 = vshll.u32 %v2138, 16
        %v2481 = vrot.slane %v2479, 5
        %v2482 = vsel %vm581, %v2477, %v2481
        %v2483 = vshrl.u32 %v2138, 16
        %v2485 = vrot.slane %v2483, 4
        %v2486 = vor.u32 %v2485, %v2481
        %v2487 = vrot.slane %v2486, 4
        %v2489 = vshll.u32 %v2139, 16
        %v2491 = vrot.slane %v2489, 5
        %v2492 = vsel %vm581, %v2487, %v2491
        %v2494 = vshrl.u32 %v2140, 16
        %v2496 = vrot.slane %v2494, 4
        %v2497 = vshll.u32 %v2140, 16
        %v2499 = vrot.slane %v2497, 5
        %v2500 = vor.u32 %v2496, %v2499
        %v2501 = vrot.slane %v2500, 4
        %v2503 = vshll.u32 %v2141, 16
        %v2505 = vrot.slane %v2503, 5
        %v2506 = vsel %vm581, %v2501, %v2505
        %v2507 = vshrl.u32 %v2141, 16
        %v2509 = vrot.slane %v2507, 4
        %v2510 = vor.u32 %v2509, %v2505
        %v2511 = vrot.slane %v2510, 4
        %v2513 = vshll.u32 %v2142, 16
        %v2515 = vrot.slane %v2513, 5
        %v2516 = vsel %vm581, %v2511, %v2515
        %s2517 = scalar_lea.vmem %s540, 14
        %v2518 = vld [vmem:[%s2517] sm:$0x3]
        %v2519 = vunpack.c.l.b16 %v2338
        %v2520 = vunpack.c.l.b16 %v2348
        %v2521 = vunpack.c.l.b16 %v2362
        %v2522 = vunpack.c.l.b16 %v2372
        %v2523 = vunpack.c.l.b16 %v2386
        %v2524 = vunpack.c.l.b16 %v2396
        %v2525 = vunpack.c.l.b16 %v2410
        %v2526 = vunpack.c.l.b16 %v2420
        %v2527 = vunpack.c.l.b16 %v2434
        %v2528 = vunpack.c.l.b16 %v2444
        %v2529 = vunpack.c.l.b16 %v2458
        %v2530 = vunpack.c.l.b16 %v2468
        %v2531 = vunpack.c.l.b16 %v2482
        %v2532 = vunpack.c.l.b16 %v2492
        %v2533 = vunpack.c.l.b16 %v2506
        %v2534 = vunpack.c.l.b16 %v2516
        %v2535 = vpack.c.b16 %v2520, %v2519
        %v2536 = vpack.c.b16 %v2522, %v2521
        %v2537 = vpack.c.b16 %v2524, %v2523
        %v2538 = vpack.c.b16 %v2526, %v2525
        %v2539 = vpack.c.b16 %v2528, %v2527
        %v2540 = vpack.c.b16 %v2530, %v2529
        %v2541 = vpack.c.b16 %v2532, %v2531
        %v2542 = vpack.c.b16 %v2534, %v2533
        %v2544 = vsel %vm800, %v2535, 0
        %v2547 = vsel %vm800, %v2536, 0
        %v2550 = vsel %vm800, %v2537, 0
        %v2553 = vsel %vm800, %v2538, 0
        %v2556 = vsel %vm800, %v2539, 0
        %v2559 = vsel %vm800, %v2540, 0
        %v2562 = vsel %vm800, %v2541, 0
        %v2565 = vsel %vm800, %v2542, 0
        %v2568 = vsel %vm825, %v2518, 0
        %2570 = vmatprep.subr.bf16.mxu0 0
        %2571 = vmatpush1.bf16.msra.mxu0 0
        %2572 = vmatprep.subr.bf16.mxu0 0
        %2573 = vmatpush1.bf16.msra.mxu0 0
        %2574 = vmatprep.subr.bf16.mxu0 0
        %2575 = vmatpush1.bf16.msra.mxu0 0
        %2576 = vmatprep.subr.bf16.mxu0 0
        %2577 = vmatpush1.bf16.msra.mxu0 0
        %2578 = vmatprep.subr.bf16.mxu0 0
        %2579 = vmatpush1.bf16.msra.mxu0 0
        %2580 = vmatprep.subr.bf16.mxu0 0
        %2581 = vmatpush1.bf16.msra.mxu0 0
        %2582 = vmatprep.subr.bf16.mxu0 0
        %2583 = vmatpush1.bf16.msra.mxu0 0
        %2584 = vmatprep.subr.bf16.mxu0 0
        %2585 = vmatpush1.bf16.msra.mxu0 %v2568
        %2586 = vmatprep.subr.bf16.mxu0 0
        %2587 = vmatpush2.bf16.msra.mxu0 0
        %2588 = vmatprep.subr.bf16.mxu0 0
        %2589 = vmatpush2.bf16.msra.mxu0 0
        %2590 = vmatprep.subr.bf16.mxu0 0
        %2591 = vmatpush2.bf16.msra.mxu0 0
        %2592 = vmatprep.subr.bf16.mxu0 0
        %2593 = vmatpush2.bf16.msra.mxu0 0
        %2594 = vmatprep.subr.bf16.mxu0 0
        %2595 = vmatpush2.bf16.msra.mxu0 0
        %2596 = vmatprep.subr.bf16.mxu0 0
        %2597 = vmatpush2.bf16.msra.mxu0 0
        %2598 = vmatprep.subr.bf16.mxu0 0
        %2599 = vmatpush2.bf16.msra.mxu0 0
        %2600 = vmatprep.subr.bf16.mxu0 0
        %2601 = vmatpush2.bf16.msra.mxu0 0
        %2602 = vmatprep.mubr.bf16.mxu0 0
        %2603 = vmatmul.mubr.bf16.gmra.mxu0 %v2544
        %v2604 = vpop.f32.mrf.mxu0
        %v2605 = vadd.f32 0.0, %v2604
        %v2606 = vpop.f32.mrf.mxu0
        %v2607 = vpop.f32.mrf.mxu0
        %v2608 = vadd.f32 0.0, %v2607
        %v2609 = vpop.f32.mrf.mxu0
        %2610 = vmatprep.mubr.bf16.mxu0 0
        %2611 = vmatmul.mubr.bf16.gmra.mxu0 %v2547
        %v2612 = vpop.f32.mrf.mxu0
        %v2613 = vadd.f32 0.0, %v2612
        %v2614 = vpop.f32.mrf.mxu0
        %v2615 = vpop.f32.mrf.mxu0
        %v2616 = vadd.f32 0.0, %v2615
        %v2617 = vpop.f32.mrf.mxu0
        %2618 = vmatprep.mubr.bf16.mxu0 0
        %2619 = vmatmul.mubr.bf16.gmra.mxu0 %v2550
        %v2620 = vpop.f32.mrf.mxu0
        %v2621 = vadd.f32 0.0, %v2620
        %v2622 = vpop.f32.mrf.mxu0
        %v2623 = vpop.f32.mrf.mxu0
        %v2624 = vadd.f32 0.0, %v2623
        %v2625 = vpop.f32.mrf.mxu0
        %2626 = vmatprep.mubr.bf16.mxu0 0
        %2627 = vmatmul.mubr.bf16.gmra.mxu0 %v2553
        %v2628 = vpop.f32.mrf.mxu0
        %v2629 = vadd.f32 0.0, %v2628
        %v2630 = vpop.f32.mrf.mxu0
        %v2631 = vpop.f32.mrf.mxu0
        %v2632 = vadd.f32 0.0, %v2631
        %v2633 = vpop.f32.mrf.mxu0
        %2634 = vmatprep.mubr.bf16.mxu0 0
        %2635 = vmatmul.mubr.bf16.gmra.mxu0 %v2556
        %v2636 = vpop.f32.mrf.mxu0
        %v2637 = vadd.f32 0.0, %v2636
        %v2638 = vpop.f32.mrf.mxu0
        %v2639 = vpop.f32.mrf.mxu0
        %v2640 = vadd.f32 0.0, %v2639
        %v2641 = vpop.f32.mrf.mxu0
        %2642 = vmatprep.mubr.bf16.mxu0 0
        %2643 = vmatmul.mubr.bf16.gmra.mxu0 %v2559
        %v2644 = vpop.f32.mrf.mxu0
        %v2645 = vadd.f32 0.0, %v2644
        %v2646 = vpop.f32.mrf.mxu0
        %v2647 = vpop.f32.mrf.mxu0
        %v2648 = vadd.f32 0.0, %v2647
        %v2649 = vpop.f32.mrf.mxu0
        %2650 = vmatprep.mubr.bf16.mxu0 0
        %2651 = vmatmul.mubr.bf16.gmra.mxu0 %v2562
        %v2652 = vpop.f32.mrf.mxu0
        %v2653 = vadd.f32 0.0, %v2652
        %v2654 = vpop.f32.mrf.mxu0
        %v2655 = vpop.f32.mrf.mxu0
        %v2656 = vadd.f32 0.0, %v2655
        %v2657 = vpop.f32.mrf.mxu0
        %2658 = vmatprep.mubr.bf16.mxu0 0
        %2659 = vmatmul.mubr.bf16.gmra.mxu0 %v2565
        %v2660 = vpop.f32.mrf.mxu0
        %v2661 = vadd.f32 0.0, %v2660
        %v2662 = vpop.f32.mrf.mxu0
        %v2663 = vpop.f32.mrf.mxu0
        %v2664 = vadd.f32 0.0, %v2663
        %v2665 = vpop.f32.mrf.mxu0
        %2666 = vdwg.mxu0
        %v2667 = vadd.f32 %v2309, %v2605
        %v2668 = vadd.f32 %v2310, %v2608
        %v2669 = vadd.f32 %v2311, %v2613
        %v2670 = vadd.f32 %v2312, %v2616
        %v2671 = vadd.f32 %v2313, %v2621
        %v2672 = vadd.f32 %v2314, %v2624
        %v2673 = vadd.f32 %v2315, %v2629
        %v2674 = vadd.f32 %v2316, %v2632
        %v2675 = vadd.f32 %v2317, %v2637
        %v2676 = vadd.f32 %v2318, %v2640
        %v2677 = vadd.f32 %v2319, %v2645
        %v2678 = vadd.f32 %v2320, %v2648
        %v2679 = vadd.f32 %v2321, %v2653
        %v2680 = vadd.f32 %v2322, %v2656
        %v2681 = vadd.f32 %v2323, %v2661
        %v2682 = vadd.f32 %v2324, %v2664
        %v2691 = vrot.slane %v2119, 5
        %v2692 = vrot.slane %v2691, 4
        %v2693 = vrot.slane %v2120, 5
        %v2694 = vsel %vm1100, %v2692, %v2693
        %v2695 = vrot.slane %v2693, 4
        %v2696 = vrot.slane %v2121, 5
        %v2697 = vsel %vm1100, %v2695, %v2696
        %v2698 = vrot.slane %v2122, 5
        %v2699 = vrot.slane %v2698, 4
        %v2700 = vrot.slane %v2123, 5
        %v2701 = vsel %vm1100, %v2699, %v2700
        %v2702 = vrot.slane %v2700, 4
        %v2703 = vrot.slane %v2124, 5
        %v2704 = vsel %vm1100, %v2702, %v2703
        %v2705 = vrot.slane %v2125, 5
        %v2706 = vrot.slane %v2705, 4
        %v2707 = vrot.slane %v2126, 5
        %v2708 = vsel %vm1100, %v2706, %v2707
        %v2709 = vrot.slane %v2707, 4
        %v2710 = vrot.slane %v2127, 5
        %v2711 = vsel %vm1100, %v2709, %v2710
        %v2712 = vrot.slane %v2128, 5
        %v2713 = vrot.slane %v2712, 4
        %v2714 = vrot.slane %v2129, 5
        %v2715 = vsel %vm1100, %v2713, %v2714
        %v2716 = vrot.slane %v2714, 4
        %v2717 = vrot.slane %v2130, 5
        %v2718 = vsel %vm1100, %v2716, %v2717
        %v2719 = vrot.slane %v2131, 5
        %v2720 = vrot.slane %v2719, 4
        %v2721 = vrot.slane %v2132, 5
        %v2722 = vsel %vm1100, %v2720, %v2721
        %v2723 = vrot.slane %v2721, 4
        %v2724 = vrot.slane %v2133, 5
        %v2725 = vsel %vm1100, %v2723, %v2724
        %v2726 = vrot.slane %v2134, 5
        %v2727 = vrot.slane %v2726, 4
        %v2728 = vrot.slane %v2135, 5
        %v2729 = vsel %vm1100, %v2727, %v2728
        %v2730 = vrot.slane %v2728, 4
        %v2731 = vrot.slane %v2136, 5
        %v2732 = vsel %vm1100, %v2730, %v2731
        %v2733 = vrot.slane %v2137, 5
        %v2734 = vrot.slane %v2733, 4
        %v2735 = vrot.slane %v2138, 5
        %v2736 = vsel %vm1100, %v2734, %v2735
        %v2737 = vrot.slane %v2735, 4
        %v2738 = vrot.slane %v2139, 5
        %v2739 = vsel %vm1100, %v2737, %v2738
        %v2740 = vrot.slane %v2140, 5
        %v2741 = vrot.slane %v2740, 4
        %v2742 = vrot.slane %v2141, 5
        %v2743 = vsel %vm1100, %v2741, %v2742
        %v2744 = vrot.slane %v2742, 4
        %v2745 = vrot.slane %v2142, 5
        %v2746 = vsel %vm1100, %v2744, %v2745
        %s2747 = scalar_lea.vmem %s540, 16
        %v2748 = vld [vmem:[%s2747] sm:$0x3]
        %v2749 = vunpack.c.l.b16 %v2694
        %v2750 = vunpack.c.l.b16 %v2697
        %v2751 = vunpack.c.l.b16 %v2701
        %v2752 = vunpack.c.l.b16 %v2704
        %v2753 = vunpack.c.l.b16 %v2708
        %v2754 = vunpack.c.l.b16 %v2711
        %v2755 = vunpack.c.l.b16 %v2715
        %v2756 = vunpack.c.l.b16 %v2718
        %v2757 = vunpack.c.l.b16 %v2722
        %v2758 = vunpack.c.l.b16 %v2725
        %v2759 = vunpack.c.l.b16 %v2729
        %v2760 = vunpack.c.l.b16 %v2732
        %v2761 = vunpack.c.l.b16 %v2736
        %v2762 = vunpack.c.l.b16 %v2739
        %v2763 = vunpack.c.l.b16 %v2743
        %v2764 = vunpack.c.l.b16 %v2746
        %v2765 = vpack.c.b16 %v2750, %v2749
        %v2766 = vpack.c.b16 %v2752, %v2751
        %v2767 = vpack.c.b16 %v2754, %v2753
        %v2768 = vpack.c.b16 %v2756, %v2755
        %v2769 = vpack.c.b16 %v2758, %v2757
        %v2770 = vpack.c.b16 %v2760, %v2759
        %v2771 = vpack.c.b16 %v2762, %v2761
        %v2772 = vpack.c.b16 %v2764, %v2763
        %v2774 = vsel %vm800, %v2765, 0
        %v2777 = vsel %vm800, %v2766, 0
        %v2780 = vsel %vm800, %v2767, 0
        %v2783 = vsel %vm800, %v2768, 0
        %v2786 = vsel %vm800, %v2769, 0
        %v2789 = vsel %vm800, %v2770, 0
        %v2792 = vsel %vm800, %v2771, 0
        %v2795 = vsel %vm800, %v2772, 0
        %v2798 = vsel %vm825, %v2748, 0
        %2800 = vmatprep.subr.bf16.mxu0 0
        %2801 = vmatpush1.bf16.msra.mxu0 0
        %2802 = vmatprep.subr.bf16.mxu0 0
        %2803 = vmatpush1.bf16.msra.mxu0 0
        %2804 = vmatprep.subr.bf16.mxu0 0
        %2805 = vmatpush1.bf16.msra.mxu0 0
        %2806 = vmatprep.subr.bf16.mxu0 0
        %2807 = vmatpush1.bf16.msra.mxu0 0
        %2808 = vmatprep.subr.bf16.mxu0 0
        %2809 = vmatpush1.bf16.msra.mxu0 0
        %2810 = vmatprep.subr.bf16.mxu0 0
        %2811 = vmatpush1.bf16.msra.mxu0 0
        %2812 = vmatprep.subr.bf16.mxu0 0
        %2813 = vmatpush1.bf16.msra.mxu0 0
        %2814 = vmatprep.subr.bf16.mxu0 0
        %2815 = vmatpush1.bf16.msra.mxu0 %v2798
        %2816 = vmatprep.subr.bf16.mxu0 0
        %2817 = vmatpush2.bf16.msra.mxu0 0
        %2818 = vmatprep.subr.bf16.mxu0 0
        %2819 = vmatpush2.bf16.msra.mxu0 0
        %2820 = vmatprep.subr.bf16.mxu0 0
        %2821 = vmatpush2.bf16.msra.mxu0 0
        %2822 = vmatprep.subr.bf16.mxu0 0
        %2823 = vmatpush2.bf16.msra.mxu0 0
        %2824 = vmatprep.subr.bf16.mxu0 0
        %2825 = vmatpush2.bf16.msra.mxu0 0
        %2826 = vmatprep.subr.bf16.mxu0 0
        %2827 = vmatpush2.bf16.msra.mxu0 0
        %2828 = vmatprep.subr.bf16.mxu0 0
        %2829 = vmatpush2.bf16.msra.mxu0 0
        %2830 = vmatprep.subr.bf16.mxu0 0
        %2831 = vmatpush2.bf16.msra.mxu0 0
        %2832 = vmatprep.mubr.bf16.mxu0 0
        %2833 = vmatmul.mubr.bf16.gmra.mxu0 %v2774
        %v2834 = vpop.f32.mrf.mxu0
        %v2835 = vadd.f32 0.0, %v2834
        %v2836 = vpop.f32.mrf.mxu0
        %v2837 = vpop.f32.mrf.mxu0
        %v2838 = vadd.f32 0.0, %v2837
        %v2839 = vpop.f32.mrf.mxu0
        %2840 = vmatprep.mubr.bf16.mxu0 0
        %2841 = vmatmul.mubr.bf16.gmra.mxu0 %v2777
        %v2842 = vpop.f32.mrf.mxu0
        %v2843 = vadd.f32 0.0, %v2842
        %v2844 = vpop.f32.mrf.mxu0
        %v2845 = vpop.f32.mrf.mxu0
        %v2846 = vadd.f32 0.0, %v2845
        %v2847 = vpop.f32.mrf.mxu0
        %2848 = vmatprep.mubr.bf16.mxu0 0
        %2849 = vmatmul.mubr.bf16.gmra.mxu0 %v2780
        %v2850 = vpop.f32.mrf.mxu0
        %v2851 = vadd.f32 0.0, %v2850
        %v2852 = vpop.f32.mrf.mxu0
        %v2853 = vpop.f32.mrf.mxu0
        %v2854 = vadd.f32 0.0, %v2853
        %v2855 = vpop.f32.mrf.mxu0
        %2856 = vmatprep.mubr.bf16.mxu0 0
        %2857 = vmatmul.mubr.bf16.gmra.mxu0 %v2783
        %v2858 = vpop.f32.mrf.mxu0
        %v2859 = vadd.f32 0.0, %v2858
        %v2860 = vpop.f32.mrf.mxu0
        %v2861 = vpop.f32.mrf.mxu0
        %v2862 = vadd.f32 0.0, %v2861
        %v2863 = vpop.f32.mrf.mxu0
        %2864 = vmatprep.mubr.bf16.mxu0 0
        %2865 = vmatmul.mubr.bf16.gmra.mxu0 %v2786
        %v2866 = vpop.f32.mrf.mxu0
        %v2867 = vadd.f32 0.0, %v2866
        %v2868 = vpop.f32.mrf.mxu0
        %v2869 = vpop.f32.mrf.mxu0
        %v2870 = vadd.f32 0.0, %v2869
        %v2871 = vpop.f32.mrf.mxu0
        %2872 = vmatprep.mubr.bf16.mxu0 0
        %2873 = vmatmul.mubr.bf16.gmra.mxu0 %v2789
        %v2874 = vpop.f32.mrf.mxu0
        %v2875 = vadd.f32 0.0, %v2874
        %v2876 = vpop.f32.mrf.mxu0
        %v2877 = vpop.f32.mrf.mxu0
        %v2878 = vadd.f32 0.0, %v2877
        %v2879 = vpop.f32.mrf.mxu0
        %2880 = vmatprep.mubr.bf16.mxu0 0
        %2881 = vmatmul.mubr.bf16.gmra.mxu0 %v2792
        %v2882 = vpop.f32.mrf.mxu0
        %v2883 = vadd.f32 0.0, %v2882
        %v2884 = vpop.f32.mrf.mxu0
        %v2885 = vpop.f32.mrf.mxu0
        %v2886 = vadd.f32 0.0, %v2885
        %v2887 = vpop.f32.mrf.mxu0
        %2888 = vmatprep.mubr.bf16.mxu0 0
        %2889 = vmatmul.mubr.bf16.gmra.mxu0 %v2795
        %v2890 = vpop.f32.mrf.mxu0
        %v2891 = vadd.f32 0.0, %v2890
        %v2892 = vpop.f32.mrf.mxu0
        %v2893 = vpop.f32.mrf.mxu0
        %v2894 = vadd.f32 0.0, %v2893
        %v2895 = vpop.f32.mrf.mxu0
        %2896 = vdwg.mxu0
        %v2897 = vadd.f32 %v2667, %v2835
        %v2898 = vadd.f32 %v2668, %v2838
        %v2899 = vadd.f32 %v2669, %v2843
        %v2900 = vadd.f32 %v2670, %v2846
        %v2901 = vadd.f32 %v2671, %v2851
        %v2902 = vadd.f32 %v2672, %v2854
        %v2903 = vadd.f32 %v2673, %v2859
        %v2904 = vadd.f32 %v2674, %v2862
        %v2905 = vadd.f32 %v2675, %v2867
        %v2906 = vadd.f32 %v2676, %v2870
        %v2907 = vadd.f32 %v2677, %v2875
        %v2908 = vadd.f32 %v2678, %v2878
        %v2909 = vadd.f32 %v2679, %v2883
        %v2910 = vadd.f32 %v2680, %v2886
        %v2911 = vadd.f32 %v2681, %v2891
        %v2912 = vadd.f32 %v2682, %v2894
        %v2913 = vld [vmem:[%s543] sm:$0x1]
        %v2915 = vlaneseq
        %v2916 = vshrl.u32 %v2915, 7
        %v2917 = vsub.s32 0, %v2916
        %v2918 = vrot.slane %v2913, %v2917
        %v2920 = vadd.f32 %v2897, %v2918
        %v2921 = vadd.f32 %v2898, %v2918
        %v2922 = vadd.f32 %v2899, %v2918
        %v2923 = vadd.f32 %v2900, %v2918
        %v2924 = vadd.f32 %v2901, %v2918
        %v2925 = vadd.f32 %v2902, %v2918
        %v2926 = vadd.f32 %v2903, %v2918
        %v2927 = vadd.f32 %v2904, %v2918
        %v2928 = vadd.f32 %v2905, %v2918
        %v2929 = vadd.f32 %v2906, %v2918
        %v2930 = vadd.f32 %v2907, %v2918
        %v2931 = vadd.f32 %v2908, %v2918
        %v2932 = vadd.f32 %v2909, %v2918
        %v2933 = vadd.f32 %v2910, %v2918
        %v2934 = vadd.f32 %v2911, %v2918
        %v2935 = vadd.f32 %v2912, %v2918
        %v2936 = vxor.u32 %v2920, 2147483648
        %v2937 = vxor.u32 %v2921, 2147483648
        %v2938 = vxor.u32 %v2922, 2147483648
        %v2939 = vxor.u32 %v2923, 2147483648
        %v2940 = vxor.u32 %v2924, 2147483648
        %v2941 = vxor.u32 %v2925, 2147483648
        %v2942 = vxor.u32 %v2926, 2147483648
        %v2943 = vxor.u32 %v2927, 2147483648
        %v2944 = vxor.u32 %v2928, 2147483648
        %v2945 = vxor.u32 %v2929, 2147483648
        %v2946 = vxor.u32 %v2930, 2147483648
        %v2947 = vxor.u32 %v2931, 2147483648
        %v2948 = vxor.u32 %v2932, 2147483648
        %v2949 = vxor.u32 %v2933, 2147483648
        %v2950 = vxor.u32 %v2934, 2147483648
        %v2951 = vxor.u32 %v2935, 2147483648
        %v2952 = vmul.f32 %v2936, 1.442695
        %v2953 = vpow.pop %v2952
        %v2954 = vmul.f32 %v2937, 1.442695
        %v2955 = vpow.pop %v2954
        %v2956 = vmul.f32 %v2938, 1.442695
        %v2957 = vpow.pop %v2956
        %v2958 = vmul.f32 %v2939, 1.442695
        %v2959 = vpow.pop %v2958
        %v2960 = vmul.f32 %v2940, 1.442695
        %v2961 = vpow.pop %v2960
        %v2962 = vmul.f32 %v2941, 1.442695
        %v2963 = vpow.pop %v2962
        %v2964 = vmul.f32 %v2942, 1.442695
        %v2965 = vpow.pop %v2964
        %v2966 = vmul.f32 %v2943, 1.442695
        %v2967 = vpow.pop %v2966
        %v2968 = vmul.f32 %v2944, 1.442695
        %v2969 = vpow.pop %v2968
        %v2970 = vmul.f32 %v2945, 1.442695
        %v2971 = vpow.pop %v2970
        %v2972 = vmul.f32 %v2946, 1.442695
        %v2973 = vpow.pop %v2972
        %v2974 = vmul.f32 %v2947, 1.442695
        %v2975 = vpow.pop %v2974
        %v2976 = vmul.f32 %v2948, 1.442695
        %v2977 = vpow.pop %v2976
        %v2978 = vmul.f32 %v2949, 1.442695
        %v2979 = vpow.pop %v2978
        %v2980 = vmul.f32 %v2950, 1.442695
        %v2981 = vpow.pop %v2980
        %v2982 = vmul.f32 %v2951, 1.442695
        %v2983 = vpow.pop %v2982
        %v2984 = vadd.f32 %v2953, 1.0
        %v2985 = vadd.f32 %v2955, 1.0
        %v2986 = vadd.f32 %v2957, 1.0
        %v2987 = vadd.f32 %v2959, 1.0
        %v2988 = vadd.f32 %v2961, 1.0
        %v2989 = vadd.f32 %v2963, 1.0
        %v2990 = vadd.f32 %v2965, 1.0
        %v2991 = vadd.f32 %v2967, 1.0
        %v2992 = vadd.f32 %v2969, 1.0
        %v2993 = vadd.f32 %v2971, 1.0
        %v2994 = vadd.f32 %v2973, 1.0
        %v2995 = vadd.f32 %v2975, 1.0
        %v2996 = vadd.f32 %v2977, 1.0
        %v2997 = vadd.f32 %v2979, 1.0
        %v2998 = vadd.f32 %v2981, 1.0
        %v2999 = vadd.f32 %v2983, 1.0
        %v3000 = vrcp.pop %v2984
        %v3001 = vmul.f32 1.0, %v3000
        %v3002 = vrcp.pop %v2985
        %v3003 = vmul.f32 1.0, %v3002
        %v3004 = vrcp.pop %v2986
        %v3005 = vmul.f32 1.0, %v3004
        %v3006 = vrcp.pop %v2987
        %v3007 = vmul.f32 1.0, %v3006
        %v3008 = vrcp.pop %v2988
        %v3009 = vmul.f32 1.0, %v3008
        %v3010 = vrcp.pop %v2989
        %v3011 = vmul.f32 1.0, %v3010
        %v3012 = vrcp.pop %v2990
        %v3013 = vmul.f32 1.0, %v3012
        %v3014 = vrcp.pop %v2991
        %v3015 = vmul.f32 1.0, %v3014
        %v3016 = vrcp.pop %v2992
        %v3017 = vmul.f32 1.0, %v3016
        %v3018 = vrcp.pop %v2993
        %v3019 = vmul.f32 1.0, %v3018
        %v3020 = vrcp.pop %v2994
        %v3021 = vmul.f32 1.0, %v3020
        %v3022 = vrcp.pop %v2995
        %v3023 = vmul.f32 1.0, %v3022
        %v3024 = vrcp.pop %v2996
        %v3025 = vmul.f32 1.0, %v3024
        %v3026 = vrcp.pop %v2997
        %v3027 = vmul.f32 1.0, %v3026
        %v3028 = vrcp.pop %v2998
        %v3029 = vmul.f32 1.0, %v3028
        %v3030 = vrcp.pop %v2999
        %v3031 = vmul.f32 1.0, %v3030
        %v3032 = vmul.f32 %v2920, %v3001
        %v3033 = vmul.f32 %v2921, %v3003
        %v3034 = vmul.f32 %v2922, %v3005
        %v3035 = vmul.f32 %v2923, %v3007
        %v3036 = vmul.f32 %v2924, %v3009
        %v3037 = vmul.f32 %v2925, %v3011
        %v3038 = vmul.f32 %v2926, %v3013
        %v3039 = vmul.f32 %v2927, %v3015
        %v3040 = vmul.f32 %v2928, %v3017
        %v3041 = vmul.f32 %v2929, %v3019
        %v3042 = vmul.f32 %v2930, %v3021
        %v3043 = vmul.f32 %v2931, %v3023
        %v3044 = vmul.f32 %v2932, %v3025
        %v3045 = vmul.f32 %v2933, %v3027
        %v3046 = vmul.f32 %v2934, %v3029
        %v3047 = vmul.f32 %v2935, %v3031
        %3048 = vst [vmem:[%s551] sm:$0xff] %v3032
        %3049 = vst [vmem:[%s551 + $0x8] sm:$0xff] %v3033
        %3050 = vst [vmem:[%s551 + $0x10] sm:$0xff] %v3034
        %3051 = vst [vmem:[%s551 + $0x18] sm:$0xff] %v3035
        %3052 = vst [vmem:[%s551 + $0x20] sm:$0xff] %v3036
        %3053 = vst [vmem:[%s551 + $0x28] sm:$0xff] %v3037
        %3054 = vst [vmem:[%s551 + $0x30] sm:$0xff] %v3038
        %3055 = vst [vmem:[%s551 + $0x38] sm:$0xff] %v3039
        %3056 = vst [vmem:[%s551 + $0x40] sm:$0xff] %v3040
        %3057 = vst [vmem:[%s551 + $0x48] sm:$0xff] %v3041
        %3058 = vst [vmem:[%s551 + $0x50] sm:$0xff] %v3042
        %3059 = vst [vmem:[%s551 + $0x58] sm:$0xff] %v3043
        %3060 = vst [vmem:[%s551 + $0x60] sm:$0xff] %v3044
        %3061 = vst [vmem:[%s551 + $0x68] sm:$0xff] %v3045
        %3062 = vst [vmem:[%s551 + $0x70] sm:$0xff] %v3046
        %3063 = vst [vmem:[%s551 + $0x78] sm:$0xff] %v3047
        %s3064 = smul.u32 16, %s18
        %p3065 = scmp.lt.s32.totalorder %s3064, 63
        %s3066 = scalar_select %p3065, %s3064, 63
        %p3067 = scmp.lt.s32.totalorder %s19, 0
        %s3068 = scalar_select %p3067, %s19, 0
        %s3069 = sadd.s32 %s3068, %s3066
        %s3070 = smul.addr %s3069, 8
        %s3071 = scalar_lea.vmem %s3, %s3070
        // Predicated region
        $region74: #{conv_bn_silu.1} parent=68 // pred_check
          %p3072 = pneg %p124
        $region75: #{conv_bn_silu.1} parent=68 // pred_check_branch
          %3074 = sbr.rel (%p3072) target = $region77
        $region76: #{conv_bn_silu.1} parent=68 // pred_region
          %s3075 = smul.u32 16, %s18
        $region77: #{conv_bn_silu.1} parent=68 // pred_fallthru
          _
      $region69: #{conv_bn_silu.1} parent=5 // pred_fallthru
        _
      %p3076 = scmp.le.s32.totalorder 2, %s9
      // Predicated region
      $region78: #{conv_bn_silu.1} parent=5 // pred_check
        %p3077 = pneg %p3076
      $region79: #{conv_bn_silu.1} parent=5 // pred_check_branch
        %3079 = sbr.rel (%p3077) target = $region81
      $region80: #{conv_bn_silu.1} parent=5 // pred_region
        %s3080 = ssub.s32 %s9, 2
        // Predicated region
        $region82: #{conv_bn_silu.1} parent=80 // pred_check
          %p3081 = pneg %p130
        $region83: #{conv_bn_silu.1} parent=80 // pred_check_branch
          %3083 = sbr.rel (%p3081) target = $region85
        $region84: #{conv_bn_silu.1} parent=80 // pred_region
          %s3084 = smul.u32 16, %s20
          %p3085 = scmp.lt.s32.totalorder %s3084, 63
          %s3086 = scalar_select %p3085, %s3084, 63
          %p3087 = scmp.lt.s32.totalorder %s21, 0
          %s3088 = scalar_select %p3087, %s21, 0
          %s3089 = sadd.s32 %s3088, %s3086
          %s3090 = smul.addr %s3089, 8
          %s3091 = scalar_lea.vmem %s3, %s3090
        $region85: #{conv_bn_silu.1} parent=80 // pred_fallthru
          _
      $region81: #{conv_bn_silu.1} parent=5 // pred_fallthru
        _
    $region6: #{conv_bn_silu.1} parent=1 // loop_footer
      %s13 = sadd.s32 1, %s9
    $region7: #{conv_bn_silu.1} parent=1 // loop_footer_branch
      %8 = sbr.rel target = $region3
    $region8: #{conv_bn_silu.1} parent=1 // loop_exit
      _

</llo_original>
